<compile_context>
chip_gen: v7x
topology: tpu7x:2x2x1
jax: 0.10.0
libtpu: 0.0.40
codegen_flags: <defaults>
</compile_context>

<pallas_src>
import functools

import jax
import jax.numpy as jnp
import numpy as np
from jax.experimental import pallas as pl
from jax.experimental.pallas import tpu as pltpu

BLOCK_SIZE = 8       # blockSiz
N_EMB = 32           # nEmb
VOCAB_SIZE = 65      # vocabSiz
VOCAB_PAD = 128      # vocab padded to a full lane width
NUM_HEADS = 4
HEAD_SIZE = N_EMB // NUM_HEADS


def bigram_kernel(B, T, ix_ref, tok_tbl_ref, pos_ref, wqkv_ref, wlmh_ref,
                  blm_ref, logits_ref):
    M = B * T
    Vpad, E = tok_tbl_ref.shape
    H, Hd, _ = wlmh_ref.shape

    # --- token embedding: gather as a lane-dense one-hot matmul (K = 128) ---
    ids = ix_ref[...]                                          # (M, 1) int32
    vocab_iota = jax.lax.broadcasted_iota(jnp.int32, (M, Vpad), 1)
    onehot = (vocab_iota == ids).astype(jnp.float32)           # (M, Vpad)
    x = jnp.dot(onehot, tok_tbl_ref[...],
                preferred_element_type=jnp.float32)            # (M, E)

    # --- positional embedding (pre-tiled to (M, E) in the wrapper) ---
    x = x + pos_ref[...]

    # --- fused Q/K/V projection for all heads: one (M,E)@(E,3E) matmul ---
    # (scale 1/sqrt(nEmb) is already folded into the Q columns of wqkv)
    qkv = jnp.dot(x, wqkv_ref[...],
                  preferred_element_type=jnp.float32)          # (M, 3E)
    qkv = qkv.reshape(B, T, 3 * E)

    # --- additive causal-mask bias, built once (no per-head where / -inf) ---
    row = jax.lax.broadcasted_iota(jnp.int32, (B, T, T), 1)
    col = jax.lax.broadcasted_iota(jnp.int32, (B, T, T), 2)
    mask_bias = jnp.where(col <= row, 0.0, -1e30).astype(jnp.float32)

    # --- logits accumulator starts from the (padded) lm-head bias ---
    logits = jnp.broadcast_to(blm_ref[...], (M, Vpad)).astype(jnp.float32)

    # --- multi-head causal attention; lm-head folded per head (no concat) ---
    for h in range(H):
        q = qkv[:, :, h * Hd:(h + 1) * Hd]                     # (B, T, Hd)
        k = qkv[:, :, E + h * Hd:E + (h + 1) * Hd]
        v = qkv[:, :, 2 * E + h * Hd:2 * E + (h + 1) * Hd]
        s = jnp.einsum('bqd,bkd->bqk', q, k,
                       preferred_element_type=jnp.float32) + mask_bias
        s = s - jnp.max(s, axis=-1, keepdims=True)
        p = jnp.exp(s)                                         # unnormalized
        denom = jnp.sum(p, axis=-1, keepdims=True)             # (B, T, 1)
        o = jnp.einsum('bqk,bkd->bqd', p, v,
                       preferred_element_type=jnp.float32)     # (B, T, Hd)
        o = o * pl.reciprocal(denom, approx=True)              # EUP divide
        logits = logits + jnp.dot(o.reshape(M, Hd), wlmh_ref[h],
                                  preferred_element_type=jnp.float32)

    logits_ref[...] = logits                                   # (M, 128) slab


def prepare_params(params):
    """One-time parameter transformation into the kernel-friendly layout."""
    E, H, Hd = N_EMB, NUM_HEADS, HEAD_SIZE
    V, Vpad = VOCAB_SIZE, VOCAB_PAD
    # NOTE: the reference scales scores by C**-0.5 with C = nEmb (not headSiz);
    # reproduced faithfully here, folded into the Q weights.
    scale = jnp.float32(1.0 / np.sqrt(E))

    def stack(w):  # (H, Hd, E) -> (E, H*Hd), columns grouped per head
        return jnp.transpose(w, (2, 0, 1)).reshape(E, H * Hd)

    wqkv = jnp.concatenate([stack(params['wq'] * scale),
                            stack(params['wk']),
                            stack(params['wv'])], axis=1)           # (E, 3E)
    # lm-head folded per head: wlmh[h] = wlm[:, h*Hd:(h+1)*Hd].T, vocab-padded
    wlmh = jnp.transpose(params['wlm'], (1, 0)).reshape(H, Hd, V)
    wlmh = jnp.pad(wlmh, ((0, 0), (0, 0), (0, Vpad - V)))           # (H, Hd, 128)
    blm = jnp.pad(params['blm'], ((0, 0), (0, Vpad - V)))           # (1, 128)
    tok = jnp.pad(params['tok_tbl'], ((0, Vpad - V), (0, 0)))       # (128, E)
    return {'tok_tbl': tok, 'pos_tbl': params['pos_tbl'],
            'wqkv': wqkv, 'wlmh': wlmh, 'blm': blm}


def bigram_forward(ix, prepped):
    B, T = ix.shape
    assert T <= BLOCK_SIZE
    M = B * T
    ix2d = ix.reshape(M, 1).astype(jnp.int32)
    pos2d = jnp.tile(prepped['pos_tbl'][:T], (B, 1))                # (M, E)

    vmem = pl.BlockSpec(memory_space=pltpu.MemorySpace.VMEM)
    logits_pad = pl.pallas_call(
        functools.partial(bigram_kernel, B, T),
        out_shape=jax.ShapeDtypeStruct((M, VOCAB_PAD), jnp.float32),
        in_specs=[vmem] * 6,
        out_specs=vmem,
    )(ix2d, prepped['tok_tbl'], pos2d, prepped['wqkv'],
      prepped['wlmh'], prepped['blm'])
    return logits_pad[:, :VOCAB_SIZE].reshape(B, T, VOCAB_SIZE)


def bigram_reference(ix, params):
    """Pure-JAX reference mirroring the PyTorch forward (targt=None)."""
    B, T = ix.shape
    tok_emb = params['tok_tbl'][ix]                       # (B, T, E)
    pos_emb = params['pos_tbl'][:T]                       # (T, E)
    x = tok_emb + pos_emb[None]
    scale = 1.0 / np.sqrt(N_EMB)                          # C**-0.5, C = nEmb
    tril = np.tril(np.ones((T, T), dtype=bool))
    outs = []
    for h in range(NUM_HEADS):
        q = x @ params['wq'][h].T
        k = x @ params['wk'][h].T
        v = x @ params['wv'][h].T
        w = jnp.einsum('bqd,bkd->bqk', q, k) * scale
        w = jnp.where(tril[None], w, -jnp.inf)
        w = jax.nn.softmax(w, axis=-1)
        outs.append(jnp.einsum('bqk,bkd->bqd', w, v))
    attn = jnp.concatenate(outs, axis=-1)
    return attn @ params['wlm'].T + params['blm'][0]


def init_params(key):
    ks = jax.random.split(key, 7)
    return {
        'tok_tbl': jax.random.normal(ks[0], (VOCAB_SIZE, N_EMB), jnp.float32) * 0.1,
        'pos_tbl': jax.random.normal(ks[1], (BLOCK_SIZE, N_EMB), jnp.float32) * 0.1,
        # stacked per-head nn.Linear(nEmb, headSiz, bias=False) weights: (H, out, in)
        'wq': jax.random.normal(ks[2], (NUM_HEADS, HEAD_SIZE, N_EMB), jnp.float32) * 0.1,
        'wk': jax.random.normal(ks[3], (NUM_HEADS, HEAD_SIZE, N_EMB), jnp.float32) * 0.1,
        'wv': jax.random.normal(ks[4], (NUM_HEADS, HEAD_SIZE, N_EMB), jnp.float32) * 0.1,
        # lmHead: nn.Linear(nEmb, vocabSiz) -> weight (V, E), bias kept 2D (1, V)
        'wlm': jax.random.normal(ks[5], (VOCAB_SIZE, N_EMB), jnp.float32) * 0.1,
        'blm': jax.random.normal(ks[6], (1, VOCAB_SIZE), jnp.float32) * 0.1,
    }


if __name__ == "__main__":
    # TODO(synk): cross-entropy loss (targt path) and generate()'s multinomial
    # sampling loop are host-side / training glue and are not implemented here.
    key = jax.random.PRNGKey(0)
    pkey, ikey = jax.random.split(key)
    params = init_params(pkey)
    prepped = prepare_params(params)

    B, T = 2, BLOCK_SIZE
    ix = jax.random.randint(ikey, (B, T), 0, VOCAB_SIZE, dtype=jnp.int32)

    logits = bigram_forward(ix, prepped)
    logits = jax.block_until_ready(logits)

    ref = bigram_reference(ix, params)
    # tolerance slack covers the EUP approximate reciprocal in the softmax
    np.testing.assert_allclose(np.asarray(logits), np.asarray(ref),
                               rtol=1e-2, atol=1e-2)
    assert logits.shape == (B, T, VOCAB_SIZE)
    print("KERNEL_OK")
</pallas_src>

<mosaic_0001>
module attributes {stable_mosaic.version = 11 : i64} {
  func.func @bigram_kernel(%arg0: memref<16x1xi32, #tpu.memory_space<vmem>>, %arg1: memref<128x32xf32, #tpu.memory_space<vmem>>, %arg2: memref<16x32xf32, #tpu.memory_space<vmem>>, %arg3: memref<32x96xf32, #tpu.memory_space<vmem>>, %arg4: memref<4x8x128xf32, #tpu.memory_space<vmem>>, %arg5: memref<1x128xf32, #tpu.memory_space<vmem>>, %arg6: memref<16x128xf32, #tpu.memory_space<vmem>>) attributes {dimension_semantics = [], scalar_prefetch = 0 : i64, scratch_operands = 0 : i64, tpu.core_type = #tpu.core_type<tc>} {
    %c0 = arith.constant 0 : index
    %c0_0 = arith.constant 0 : index
    %0 = vector.load %arg0[%c0, %c0_0] : memref<16x1xi32, #tpu.memory_space<vmem>>, vector<16x1xi32>
    %1 = tpu.iota {dimensions = array<i32: 1>} : vector<16x128xi32>
    %2 = vector.broadcast %0 : vector<16x1xi32> to vector<16x128xi32>
    %3 = arith.cmpi eq, %1, %2 : vector<16x128xi32>
    %4 = arith.extui %3 : vector<16x128xi1> to vector<16x128xi32>
    %5 = arith.sitofp %4 : vector<16x128xi32> to vector<16x128xf32>
    %c0_1 = arith.constant 0 : index
    %c0_2 = arith.constant 0 : index
    %6 = vector.load %arg1[%c0_1, %c0_2] : memref<128x32xf32, #tpu.memory_space<vmem>>, vector<128x32xf32>
    %cst = arith.constant dense<0.000000e+00> : vector<16x32xf32>
    %7 = tpu.matmul %5, %6, %cst {dimension_numbers = #tpu.dot_dimension_numbers<[1], [0], [0], [1], [0, 0, 1, 1], [], []>} : vector<16x128xf32>, vector<128x32xf32>, vector<16x32xf32> -> vector<16x32xf32>
    %c0_3 = arith.constant 0 : index
    %c0_4 = arith.constant 0 : index
    %8 = vector.load %arg2[%c0_3, %c0_4] : memref<16x32xf32, #tpu.memory_space<vmem>>, vector<16x32xf32>
    %9 = arith.addf %7, %8 : vector<16x32xf32>
    %c0_5 = arith.constant 0 : index
    %c0_6 = arith.constant 0 : index
    %10 = vector.load %arg3[%c0_5, %c0_6] : memref<32x96xf32, #tpu.memory_space<vmem>>, vector<32x96xf32>
    %cst_7 = arith.constant dense<0.000000e+00> : vector<16x96xf32>
    %11 = tpu.matmul %9, %10, %cst_7 {dimension_numbers = #tpu.dot_dimension_numbers<[1], [0], [0], [1], [0, 0, 1, 1], [], []>} : vector<16x32xf32>, vector<32x96xf32>, vector<16x96xf32> -> vector<16x96xf32>
    %12 = vector.shape_cast %11 : vector<16x96xf32> to vector<2x8x96xf32>
    %13 = tpu.iota {dimensions = array<i32: 1>} : vector<2x8x8xi32>
    %14 = tpu.iota {dimensions = array<i32: 2>} : vector<2x8x8xi32>
    %15 = arith.cmpi sle, %14, %13 : vector<2x8x8xi32>
    %cst_8 = arith.constant 0.000000e+00 : f32
    %cst_9 = arith.constant -1.000000e+30 : f32
    %16 = vector.broadcast %cst_8 : f32 to vector<2x8x8xf32>
    %17 = vector.broadcast %cst_9 : f32 to vector<2x8x8xf32>
    %18 = arith.select %15, %16, %17 : vector<2x8x8xi1>, vector<2x8x8xf32>
    %c0_10 = arith.constant 0 : index
    %c0_11 = arith.constant 0 : index
    %19 = vector.load %arg5[%c0_10, %c0_11] : memref<1x128xf32, #tpu.memory_space<vmem>>, vector<1x128xf32>
    %20 = vector.shape_cast %19 : vector<1x128xf32> to vector<1x128xf32>
    %21 = vector.broadcast %20 : vector<1x128xf32> to vector<16x128xf32>
    %22 = vector.extract_strided_slice %12 {offsets = [0, 0, 0], sizes = [2, 8, 8], strides = [1, 1, 1]} : vector<2x8x96xf32> to vector<2x8x8xf32>
    %23 = vector.extract_strided_slice %12 {offsets = [0, 0, 32], sizes = [2, 8, 8], strides = [1, 1, 1]} : vector<2x8x96xf32> to vector<2x8x8xf32>
    %24 = vector.extract_strided_slice %12 {offsets = [0, 0, 64], sizes = [2, 8, 8], strides = [1, 1, 1]} : vector<2x8x96xf32> to vector<2x8x8xf32>
    "tpu.trace_start"() <{level = 10 : i32, message = "bqd,bkd->bqk"}> : () -> ()
    %cst_12 = arith.constant dense<0.000000e+00> : vector<2x8x8xf32>
    %25 = tpu.matmul %22, %23, %cst_12 {dimension_numbers = #tpu.dot_dimension_numbers<[2], [2], [1], [1], [0, 0, 0, 1, 1, 1], [0], [0]>} : vector<2x8x8xf32>, vector<2x8x8xf32>, vector<2x8x8xf32> -> vector<2x8x8xf32>
    "tpu.trace_stop"() : () -> ()
    %26 = arith.addf %25, %18 : vector<2x8x8xf32>
    %cst_13 = arith.constant dense<0xFF800000> : vector<2x8xf32>
    %27 = vector.multi_reduction <maximumf>, %26, %cst_13 [2] : vector<2x8x8xf32> to vector<2x8xf32>
    %28 = vector.shape_cast %27 : vector<2x8xf32> to vector<2x8x1xf32>
    %29 = vector.broadcast %28 : vector<2x8x1xf32> to vector<2x8x8xf32>
    %30 = arith.subf %26, %29 : vector<2x8x8xf32>
    %31 = math.exp %30 : vector<2x8x8xf32>
    %cst_14 = arith.constant dense<0.000000e+00> : vector<2x8xf32>
    %32 = vector.multi_reduction <add>, %31, %cst_14 [2] : vector<2x8x8xf32> to vector<2x8xf32>
    %33 = vector.shape_cast %32 : vector<2x8xf32> to vector<2x8x1xf32>
    "tpu.trace_start"() <{level = 10 : i32, message = "bqk,bkd->bqd"}> : () -> ()
    %cst_15 = arith.constant dense<0.000000e+00> : vector<2x8x8xf32>
    %34 = tpu.matmul %31, %24, %cst_15 {dimension_numbers = #tpu.dot_dimension_numbers<[2], [1], [1], [2], [0, 0, 0, 1, 1, 2], [0], [0]>} : vector<2x8x8xf32>, vector<2x8x8xf32>, vector<2x8x8xf32> -> vector<2x8x8xf32>
    "tpu.trace_stop"() : () -> ()
    %35 = tpu.reciprocal %33 {approx = true} : vector<2x8x1xf32> -> vector<2x8x1xf32>
    %36 = vector.broadcast %35 : vector<2x8x1xf32> to vector<2x8x8xf32>
    %37 = arith.mulf %34, %36 : vector<2x8x8xf32>
    %38 = vector.shape_cast %37 : vector<2x8x8xf32> to vector<16x8xf32>
    %c0_16 = arith.constant 0 : index
    %c0_17 = arith.constant 0 : index
    %c0_18 = arith.constant 0 : index
    %39 = vector.load %arg4[%c0_16, %c0_17, %c0_18] : memref<4x8x128xf32, #tpu.memory_space<vmem>>, vector<1x8x128xf32>
    %40 = vector.shape_cast %39 : vector<1x8x128xf32> to vector<8x128xf32>
    %cst_19 = arith.constant dense<0.000000e+00> : vector<16x128xf32>
    %41 = tpu.matmul %38, %40, %cst_19 {dimension_numbers = #tpu.dot_dimension_numbers<[1], [0], [0], [1], [0, 0, 1, 1], [], []>} : vector<16x8xf32>, vector<8x128xf32>, vector<16x128xf32> -> vector<16x128xf32>
    %42 = arith.addf %21, %41 : vector<16x128xf32>
    %43 = vector.extract_strided_slice %12 {offsets = [0, 0, 8], sizes = [2, 8, 8], strides = [1, 1, 1]} : vector<2x8x96xf32> to vector<2x8x8xf32>
    %44 = vector.extract_strided_slice %12 {offsets = [0, 0, 40], sizes = [2, 8, 8], strides = [1, 1, 1]} : vector<2x8x96xf32> to vector<2x8x8xf32>
    %45 = vector.extract_strided_slice %12 {offsets = [0, 0, 72], sizes = [2, 8, 8], strides = [1, 1, 1]} : vector<2x8x96xf32> to vector<2x8x8xf32>
    "tpu.trace_start"() <{level = 10 : i32, message = "bqd,bkd->bqk"}> : () -> ()
    %cst_20 = arith.constant dense<0.000000e+00> : vector<2x8x8xf32>
    %46 = tpu.matmul %43, %44, %cst_20 {dimension_numbers = #tpu.dot_dimension_numbers<[2], [2], [1], [1], [0, 0, 0, 1, 1, 1], [0], [0]>} : vector<2x8x8xf32>, vector<2x8x8xf32>, vector<2x8x8xf32> -> vector<2x8x8xf32>
    "tpu.trace_stop"() : () -> ()
    %47 = arith.addf %46, %18 : vector<2x8x8xf32>
    %cst_21 = arith.constant dense<0xFF800000> : vector<2x8xf32>
    %48 = vector.multi_reduction <maximumf>, %47, %cst_21 [2] : vector<2x8x8xf32> to vector<2x8xf32>
    %49 = vector.shape_cast %48 : vector<2x8xf32> to vector<2x8x1xf32>
    %50 = vector.broadcast %49 : vector<2x8x1xf32> to vector<2x8x8xf32>
    %51 = arith.subf %47, %50 : vector<2x8x8xf32>
    %52 = math.exp %51 : vector<2x8x8xf32>
    %cst_22 = arith.constant dense<0.000000e+00> : vector<2x8xf32>
    %53 = vector.multi_reduction <add>, %52, %cst_22 [2] : vector<2x8x8xf32> to vector<2x8xf32>
    %54 = vector.shape_cast %53 : vector<2x8xf32> to vector<2x8x1xf32>
    "tpu.trace_start"() <{level = 10 : i32, message = "bqk,bkd->bqd"}> : () -> ()
    %cst_23 = arith.constant dense<0.000000e+00> : vector<2x8x8xf32>
    %55 = tpu.matmul %52, %45, %cst_23 {dimension_numbers = #tpu.dot_dimension_numbers<[2], [1], [1], [2], [0, 0, 0, 1, 1, 2], [0], [0]>} : vector<2x8x8xf32>, vector<2x8x8xf32>, vector<2x8x8xf32> -> vector<2x8x8xf32>
    "tpu.trace_stop"() : () -> ()
    %56 = tpu.reciprocal %54 {approx = true} : vector<2x8x1xf32> -> vector<2x8x1xf32>
    %57 = vector.broadcast %56 : vector<2x8x1xf32> to vector<2x8x8xf32>
    %58 = arith.mulf %55, %57 : vector<2x8x8xf32>
    %59 = vector.shape_cast %58 : vector<2x8x8xf32> to vector<16x8xf32>
    %c1 = arith.constant 1 : index
    %c0_24 = arith.constant 0 : index
    %c0_25 = arith.constant 0 : index
    %60 = vector.load %arg4[%c1, %c0_24, %c0_25] : memref<4x8x128xf32, #tpu.memory_space<vmem>>, vector<1x8x128xf32>
    %61 = vector.shape_cast %60 : vector<1x8x128xf32> to vector<8x128xf32>
    %cst_26 = arith.constant dense<0.000000e+00> : vector<16x128xf32>
    %62 = tpu.matmul %59, %61, %cst_26 {dimension_numbers = #tpu.dot_dimension_numbers<[1], [0], [0], [1], [0, 0, 1, 1], [], []>} : vector<16x8xf32>, vector<8x128xf32>, vector<16x128xf32> -> vector<16x128xf32>
    %63 = arith.addf %42, %62 : vector<16x128xf32>
    %64 = vector.extract_strided_slice %12 {offsets = [0, 0, 16], sizes = [2, 8, 8], strides = [1, 1, 1]} : vector<2x8x96xf32> to vector<2x8x8xf32>
    %65 = vector.extract_strided_slice %12 {offsets = [0, 0, 48], sizes = [2, 8, 8], strides = [1, 1, 1]} : vector<2x8x96xf32> to vector<2x8x8xf32>
    %66 = vector.extract_strided_slice %12 {offsets = [0, 0, 80], sizes = [2, 8, 8], strides = [1, 1, 1]} : vector<2x8x96xf32> to vector<2x8x8xf32>
    "tpu.trace_start"() <{level = 10 : i32, message = "bqd,bkd->bqk"}> : () -> ()
    %cst_27 = arith.constant dense<0.000000e+00> : vector<2x8x8xf32>
    %67 = tpu.matmul %64, %65, %cst_27 {dimension_numbers = #tpu.dot_dimension_numbers<[2], [2], [1], [1], [0, 0, 0, 1, 1, 1], [0], [0]>} : vector<2x8x8xf32>, vector<2x8x8xf32>, vector<2x8x8xf32> -> vector<2x8x8xf32>
    "tpu.trace_stop"() : () -> ()
    %68 = arith.addf %67, %18 : vector<2x8x8xf32>
    %cst_28 = arith.constant dense<0xFF800000> : vector<2x8xf32>
    %69 = vector.multi_reduction <maximumf>, %68, %cst_28 [2] : vector<2x8x8xf32> to vector<2x8xf32>
    %70 = vector.shape_cast %69 : vector<2x8xf32> to vector<2x8x1xf32>
    %71 = vector.broadcast %70 : vector<2x8x1xf32> to vector<2x8x8xf32>
    %72 = arith.subf %68, %71 : vector<2x8x8xf32>
    %73 = math.exp %72 : vector<2x8x8xf32>
    %cst_29 = arith.constant dense<0.000000e+00> : vector<2x8xf32>
    %74 = vector.multi_reduction <add>, %73, %cst_29 [2] : vector<2x8x8xf32> to vector<2x8xf32>
    %75 = vector.shape_cast %74 : vector<2x8xf32> to vector<2x8x1xf32>
    "tpu.trace_start"() <{level = 10 : i32, message = "bqk,bkd->bqd"}> : () -> ()
    %cst_30 = arith.constant dense<0.000000e+00> : vector<2x8x8xf32>
    %76 = tpu.matmul %73, %66, %cst_30 {dimension_numbers = #tpu.dot_dimension_numbers<[2], [1], [1], [2], [0, 0, 0, 1, 1, 2], [0], [0]>} : vector<2x8x8xf32>, vector<2x8x8xf32>, vector<2x8x8xf32> -> vector<2x8x8xf32>
    "tpu.trace_stop"() : () -> ()
    %77 = tpu.reciprocal %75 {approx = true} : vector<2x8x1xf32> -> vector<2x8x1xf32>
    %78 = vector.broadcast %77 : vector<2x8x1xf32> to vector<2x8x8xf32>
    %79 = arith.mulf %76, %78 : vector<2x8x8xf32>
    %80 = vector.shape_cast %79 : vector<2x8x8xf32> to vector<16x8xf32>
    %c2 = arith.constant 2 : index
    %c0_31 = arith.constant 0 : index
    %c0_32 = arith.constant 0 : index
    %81 = vector.load %arg4[%c2, %c0_31, %c0_32] : memref<4x8x128xf32, #tpu.memory_space<vmem>>, vector<1x8x128xf32>
    %82 = vector.shape_cast %81 : vector<1x8x128xf32> to vector<8x128xf32>
    %cst_33 = arith.constant dense<0.000000e+00> : vector<16x128xf32>
    %83 = tpu.matmul %80, %82, %cst_33 {dimension_numbers = #tpu.dot_dimension_numbers<[1], [0], [0], [1], [0, 0, 1, 1], [], []>} : vector<16x8xf32>, vector<8x128xf32>, vector<16x128xf32> -> vector<16x128xf32>
    %84 = arith.addf %63, %83 : vector<16x128xf32>
    %85 = vector.extract_strided_slice %12 {offsets = [0, 0, 24], sizes = [2, 8, 8], strides = [1, 1, 1]} : vector<2x8x96xf32> to vector<2x8x8xf32>
    %86 = vector.extract_strided_slice %12 {offsets = [0, 0, 56], sizes = [2, 8, 8], strides = [1, 1, 1]} : vector<2x8x96xf32> to vector<2x8x8xf32>
    %87 = vector.extract_strided_slice %12 {offsets = [0, 0, 88], sizes = [2, 8, 8], strides = [1, 1, 1]} : vector<2x8x96xf32> to vector<2x8x8xf32>
    "tpu.trace_start"() <{level = 10 : i32, message = "bqd,bkd->bqk"}> : () -> ()
    %cst_34 = arith.constant dense<0.000000e+00> : vector<2x8x8xf32>
    %88 = tpu.matmul %85, %86, %cst_34 {dimension_numbers = #tpu.dot_dimension_numbers<[2], [2], [1], [1], [0, 0, 0, 1, 1, 1], [0], [0]>} : vector<2x8x8xf32>, vector<2x8x8xf32>, vector<2x8x8xf32> -> vector<2x8x8xf32>
    "tpu.trace_stop"() : () -> ()
    %89 = arith.addf %88, %18 : vector<2x8x8xf32>
    %cst_35 = arith.constant dense<0xFF800000> : vector<2x8xf32>
    %90 = vector.multi_reduction <maximumf>, %89, %cst_35 [2] : vector<2x8x8xf32> to vector<2x8xf32>
    %91 = vector.shape_cast %90 : vector<2x8xf32> to vector<2x8x1xf32>
    %92 = vector.broadcast %91 : vector<2x8x1xf32> to vector<2x8x8xf32>
    %93 = arith.subf %89, %92 : vector<2x8x8xf32>
    %94 = math.exp %93 : vector<2x8x8xf32>
    %cst_36 = arith.constant dense<0.000000e+00> : vector<2x8xf32>
    %95 = vector.multi_reduction <add>, %94, %cst_36 [2] : vector<2x8x8xf32> to vector<2x8xf32>
    %96 = vector.shape_cast %95 : vector<2x8xf32> to vector<2x8x1xf32>
    "tpu.trace_start"() <{level = 10 : i32, message = "bqk,bkd->bqd"}> : () -> ()
    %cst_37 = arith.constant dense<0.000000e+00> : vector<2x8x8xf32>
    %97 = tpu.matmul %94, %87, %cst_37 {dimension_numbers = #tpu.dot_dimension_numbers<[2], [1], [1], [2], [0, 0, 0, 1, 1, 2], [0], [0]>} : vector<2x8x8xf32>, vector<2x8x8xf32>, vector<2x8x8xf32> -> vector<2x8x8xf32>
    "tpu.trace_stop"() : () -> ()
    %98 = tpu.reciprocal %96 {approx = true} : vector<2x8x1xf32> -> vector<2x8x1xf32>
    %99 = vector.broadcast %98 : vector<2x8x1xf32> to vector<2x8x8xf32>
    %100 = arith.mulf %97, %99 : vector<2x8x8xf32>
    %101 = vector.shape_cast %100 : vector<2x8x8xf32> to vector<16x8xf32>
    %c3 = arith.constant 3 : index
    %c0_38 = arith.constant 0 : index
    %c0_39 = arith.constant 0 : index
    %102 = vector.load %arg4[%c3, %c0_38, %c0_39] : memref<4x8x128xf32, #tpu.memory_space<vmem>>, vector<1x8x128xf32>
    %103 = vector.shape_cast %102 : vector<1x8x128xf32> to vector<8x128xf32>
    %cst_40 = arith.constant dense<0.000000e+00> : vector<16x128xf32>
    %104 = tpu.matmul %101, %103, %cst_40 {dimension_numbers = #tpu.dot_dimension_numbers<[1], [0], [0], [1], [0, 0, 1, 1], [], []>} : vector<16x8xf32>, vector<8x128xf32>, vector<16x128xf32> -> vector<16x128xf32>
    %105 = arith.addf %84, %104 : vector<16x128xf32>
    %c0_41 = arith.constant 0 : index
    %c0_42 = arith.constant 0 : index
    %106 = vector.load %arg6[%c0_41, %c0_42] : memref<16x128xf32, #tpu.memory_space<vmem>>, vector<16x128xf32>
    tpu.vector_store %arg6[%c0_41, %c0_42], %105 {strides = array<i32>} : memref<16x128xf32, #tpu.memory_space<vmem>>, vector<16x128xf32>,
    return
  }
}

</mosaic_0001>

<llo_original>
// kernel: tpu_custom_call.1
$region0: #{tpu_custom_call.1}
  #allocation0 [shape = 'u32[]', space=smem, size = 0x4, offset = 0x4, fixed_abs, tag = 'smem constant byte address 0x4 - core index']
  #allocation1 [shape = 'u32[144,128]{1,0:T(1,128)}', space=vmem, size = 0x12000, scoped, tag = 'internal scratch']
  %s0 = inlined_call_operand.vmem [shape: s32[16,1], index: 0, kind: input, shape index: {}]
  %s1 = inlined_call_operand.vmem [shape: f32[128,32], index: 1, kind: input, shape index: {}]
  %s2 = inlined_call_operand.vmem [shape: f32[16,32], index: 2, kind: input, shape index: {}]
  %s3 = inlined_call_operand.vmem [shape: f32[32,96], index: 3, kind: input, shape index: {}]
  %s4 = inlined_call_operand.vmem [shape: f32[4,8,128], index: 4, kind: input, shape index: {}]
  %s5 = inlined_call_operand.vmem [shape: f32[1,128], index: 5, kind: input, shape index: {}]
  %s6 = inlined_call_operand.hbm [shape: f32[16,128], index: 6, kind: output, shape index: {}]
  %s7 = sld [smem:[#allocation0]]
  $region34: #{tpu_custom_call.1} parent=0
    _
  %s9 = ssub.s32 1, %s7
  %s10 = scalar_select 0, %s9, %s7
  $region1: #{tpu_custom_call.1} parent=0
    #allocation2 [shape = 'u8[8192]{0}', space=vmem, size = 0x2000, scoped, tag = 'output window, operand 0, single buffered']
    #allocation3 [shape = 's32[1]{0}', space=sflag, size = 0x4, scoped, tag = 'scoped memory for tpu_custom_call.1']
    %11 = vsyncpa [#allocation3], 0
    // Predicated region
    $region2: #{tpu_custom_call.1} parent=1 // pred_check
      _
    $region3: #{tpu_custom_call.1} parent=1 // pred_check_branch
      %13 = sbr.rel (0) target = $region5
    $region4: #{tpu_custom_call.1} parent=1 // pred_region
      _
    $region5: #{tpu_custom_call.1} parent=1 // pred_fallthru
      _
    // Predicated region
    $region6: #{tpu_custom_call.1} parent=1 // pred_check
      _
    $region7: #{tpu_custom_call.1} parent=1 // pred_check_branch
      %15 = sbr.rel (0) target = $region9
    $region8: #{tpu_custom_call.1} parent=1 // pred_region
      _
    $region9: #{tpu_custom_call.1} parent=1 // pred_fallthru
      _
    // Predicated region
    $region10: #{tpu_custom_call.1} parent=1 // pred_check
      _
    $region11: #{tpu_custom_call.1} parent=1 // pred_check_branch
      %17 = sbr.rel (0) target = $region13
    $region12: #{tpu_custom_call.1} parent=1 // pred_region
      _
    $region13: #{tpu_custom_call.1} parent=1 // pred_fallthru
      _
    // Predicated region
    $region14: #{tpu_custom_call.1} parent=1 // pred_check
      _
    $region15: #{tpu_custom_call.1} parent=1 // pred_check_branch
      %19 = sbr.rel (0) target = $region17
    $region16: #{tpu_custom_call.1} parent=1 // pred_region
      _
    $region17: #{tpu_custom_call.1} parent=1 // pred_fallthru
      _
    // Predicated region
    $region18: #{tpu_custom_call.1} parent=1 // pred_check
      _
    $region19: #{tpu_custom_call.1} parent=1 // pred_check_branch
      %21 = sbr.rel (0) target = $region21
    $region20: #{tpu_custom_call.1} parent=1 // pred_region
      _
    $region21: #{tpu_custom_call.1} parent=1 // pred_fallthru
      _
    // Predicated region
    $region22: #{tpu_custom_call.1} parent=1 // pred_check
      _
    $region23: #{tpu_custom_call.1} parent=1 // pred_check_branch
      %23 = sbr.rel (0) target = $region25
    $region24: #{tpu_custom_call.1} parent=1 // pred_region
      _
    $region25: #{tpu_custom_call.1} parent=1 // pred_fallthru
      _
    %v24 = vld [vmem:[%s0] sm:$0xff]
    %v25 = vld [vmem:[%s0 + $0x8] sm:$0xff]
    %v26 = vlaneseq
    %v27 = vand.u32 %v26, 127
    %28 = vset.pattern.permute.xlu0 0
    %29 = vperm.xlu0 %28, %v24
    %v30 = vpop.permute.xlu0 %29
    %31 = vset.pattern.permute.xlu0 0
    %32 = vperm.xlu0 %31, %v25
    %v33 = vpop.permute.xlu0 %32
    %vm34 = vcmp.eq.s32.totalorder %v27, %v30
    %vm35 = vcmp.eq.s32.totalorder %v27, %v33
    %v36 = vsel %vm34, 1, 0
    %v37 = vsel %vm35, 1, 0
    %v38 = vcvt.s32.f32 %v36
    %v39 = vcvt.s32.f32 %v37
    %v40 = vld [vmem:[%s1] sm:$0xff]
    %v41 = vld [vmem:[%s1 + $0x8] sm:$0xff]
    %v42 = vld [vmem:[%s1 + $0x10] sm:$0xff]
    %v43 = vld [vmem:[%s1 + $0x18] sm:$0xff]
    %v44 = vld [vmem:[%s1 + $0x20] sm:$0xff]
    %v45 = vld [vmem:[%s1 + $0x28] sm:$0xff]
    %v46 = vld [vmem:[%s1 + $0x30] sm:$0xff]
    %v47 = vld [vmem:[%s1 + $0x38] sm:$0xff]
    %v48 = vld [vmem:[%s1 + $0x40] sm:$0xff]
    %v49 = vld [vmem:[%s1 + $0x48] sm:$0xff]
    %v50 = vld [vmem:[%s1 + $0x50] sm:$0xff]
    %v51 = vld [vmem:[%s1 + $0x58] sm:$0xff]
    %v52 = vld [vmem:[%s1 + $0x60] sm:$0xff]
    %v53 = vld [vmem:[%s1 + $0x68] sm:$0xff]
    %v54 = vld [vmem:[%s1 + $0x70] sm:$0xff]
    %v55 = vld [vmem:[%s1 + $0x78] sm:$0xff]
    %v56 = vld [vmem:[%s2] sm:$0xff]
    %v57 = vld [vmem:[%s2 + $0x8] sm:$0xff]
    %58 = vmatprep.subr.mxu0 0.0
    %59 = vmatpush1.msra.mxu0 %v40
    %60 = vmatprep.subr.mxu0 0.0
    %61 = vmatpush1.msra.mxu0 %v41
    %62 = vmatprep.subr.mxu0 0.0
    %63 = vmatpush1.msra.mxu0 %v42
    %64 = vmatprep.subr.mxu0 0.0
    %65 = vmatpush1.msra.mxu0 %v43
    %66 = vmatprep.subr.mxu0 0.0
    %67 = vmatpush1.msra.mxu0 %v44
    %68 = vmatprep.subr.mxu0 0.0
    %69 = vmatpush1.msra.mxu0 %v45
    %70 = vmatprep.subr.mxu0 0.0
    %71 = vmatpush1.msra.mxu0 %v46
    %72 = vmatprep.subr.mxu0 0.0
    %73 = vmatpush1.msra.mxu0 %v47
    %74 = vmatprep.subr.mxu0 0.0
    %75 = vmatpush1.msra.mxu0 %v48
    %76 = vmatprep.subr.mxu0 0.0
    %77 = vmatpush1.msra.mxu0 %v49
    %78 = vmatprep.subr.mxu0 0.0
    %79 = vmatpush1.msra.mxu0 %v50
    %80 = vmatprep.subr.mxu0 0.0
    %81 = vmatpush1.msra.mxu0 %v51
    %82 = vmatprep.subr.mxu0 0.0
    %83 = vmatpush1.msra.mxu0 %v52
    %84 = vmatprep.subr.mxu0 0.0
    %85 = vmatpush1.msra.mxu0 %v53
    %86 = vmatprep.subr.mxu0 0.0
    %87 = vmatpush1.msra.mxu0 %v54
    %88 = vmatprep.subr.mxu0 0.0
    %89 = vmatpush1.msra.mxu0 %v55
    %90 = vmatprep.subr.mxu0 0.0
    %91 = vmatpush1.msra.mxu0 0.0
    %92 = vmatprep.subr.mxu0 0.0
    %93 = vmatpush1.msra.mxu0 0.0
    %94 = vmatprep.subr.mxu0 0.0
    %95 = vmatpush1.msra.mxu0 0.0
    %96 = vmatprep.subr.mxu0 0.0
    %97 = vmatpush1.msra.mxu0 0.0
    %98 = vmatprep.subr.mxu0 0.0
    %99 = vmatpush1.msra.mxu0 0.0
    %100 = vmatprep.subr.mxu0 0.0
    %101 = vmatpush1.msra.mxu0 0.0
    %102 = vmatprep.subr.mxu0 0.0
    %103 = vmatpush1.msra.mxu0 0.0
    %104 = vmatprep.subr.mxu0 0.0
    %105 = vmatpush1.msra.mxu0 0.0
    %106 = vmatprep.subr.mxu0 0.0
    %107 = vmatpush1.msra.mxu0 0.0
    %108 = vmatprep.subr.mxu0 0.0
    %109 = vmatpush1.msra.mxu0 0.0
    %110 = vmatprep.subr.mxu0 0.0
    %111 = vmatpush1.msra.mxu0 0.0
    %112 = vmatprep.subr.mxu0 0.0
    %113 = vmatpush1.msra.mxu0 0.0
    %114 = vmatprep.subr.mxu0 0.0
    %115 = vmatpush1.msra.mxu0 0.0
    %116 = vmatprep.subr.mxu0 0.0
    %117 = vmatpush1.msra.mxu0 0.0
    %118 = vmatprep.subr.mxu0 0.0
    %119 = vmatpush1.msra.mxu0 0.0
    %120 = vmatprep.subr.mxu0 0.0
    %121 = vmatpush1.msra.mxu0 0.0
    %122 = vmatprep.mubr.f32.mxu0 0.0
    %123 = vmatmul.mubr.f32.gmra.mrb[0].mxu0 %v38
    %v124 = vpop.f32.mrb[0].mxu0
    %v125 = vadd.f32 %v56, %v124
    %v126 = vpop.f32.mrb[0].mxu0
    %127 = vmatprep.mubr.f32.mxu0 0.0
    %128 = vmatmul.mubr.f32.gmra.mrb[0].mxu0 %v39
    %v129 = vpop.f32.mrb[0].mxu0
    %v130 = vadd.f32 %v57, %v129
    %v131 = vpop.f32.mrb[0].mxu0
    %132 = vdwg.mxu0
    %v133 = vld [vmem:[%s3] sm:$0xff]
    %v134 = vld [vmem:[%s3 + $0x8] sm:$0xff]
    %v135 = vld [vmem:[%s3 + $0x10] sm:$0xff]
    %v136 = vld [vmem:[%s3 + $0x18] sm:$0xff]
    %vm137 = vcmask 261120
    %v139 = vsel %vm137, %v125, 0
    %v142 = vsel %vm137, %v130, 0
    %144 = vmatprep.subr.mxu0 0.0
    %145 = vmatpush1.msra.mxu0 %v133
    %146 = vmatprep.subr.mxu0 0.0
    %147 = vmatpush1.msra.mxu0 %v134
    %148 = vmatprep.subr.mxu0 0.0
    %149 = vmatpush1.msra.mxu0 %v135
    %150 = vmatprep.subr.mxu0 0.0
    %151 = vmatpush1.msra.mxu0 %v136
    %152 = vmatprep.subr.mxu0 0.0
    %153 = vmatpush1.msra.mxu0 0.0
    %154 = vmatprep.subr.mxu0 0.0
    %155 = vmatpush1.msra.mxu0 0.0
    %156 = vmatprep.subr.mxu0 0.0
    %157 = vmatpush1.msra.mxu0 0.0
    %158 = vmatprep.subr.mxu0 0.0
    %159 = vmatpush1.msra.mxu0 0.0
    %160 = vmatprep.subr.mxu0 0.0
    %161 = vmatpush1.msra.mxu0 0.0
    %162 = vmatprep.subr.mxu0 0.0
    %163 = vmatpush1.msra.mxu0 0.0
    %164 = vmatprep.subr.mxu0 0.0
    %165 = vmatpush1.msra.mxu0 0.0
    %166 = vmatprep.subr.mxu0 0.0
    %167 = vmatpush1.msra.mxu0 0.0
    %168 = vmatprep.subr.mxu0 0.0
    %169 = vmatpush1.msra.mxu0 0.0
    %170 = vmatprep.subr.mxu0 0.0
    %171 = vmatpush1.msra.mxu0 0.0
    %172 = vmatprep.subr.mxu0 0.0
    %173 = vmatpush1.msra.mxu0 0.0
    %174 = vmatprep.subr.mxu0 0.0
    %175 = vmatpush1.msra.mxu0 0.0
    %176 = vmatprep.subr.mxu0 0.0
    %177 = vmatpush1.msra.mxu0 0.0
    %178 = vmatprep.subr.mxu0 0.0
    %179 = vmatpush1.msra.mxu0 0.0
    %180 = vmatprep.subr.mxu0 0.0
    %181 = vmatpush1.msra.mxu0 0.0
    %182 = vmatprep.subr.mxu0 0.0
    %183 = vmatpush1.msra.mxu0 0.0
    %184 = vmatprep.subr.mxu0 0.0
    %185 = vmatpush1.msra.mxu0 0.0
    %186 = vmatprep.subr.mxu0 0.0
    %187 = vmatpush1.msra.mxu0 0.0
    %188 = vmatprep.subr.mxu0 0.0
    %189 = vmatpush1.msra.mxu0 0.0
    %190 = vmatprep.subr.mxu0 0.0
    %191 = vmatpush1.msra.mxu0 0.0
    %192 = vmatprep.subr.mxu0 0.0
    %193 = vmatpush1.msra.mxu0 0.0
    %194 = vmatprep.subr.mxu0 0.0
    %195 = vmatpush1.msra.mxu0 0.0
    %196 = vmatprep.subr.mxu0 0.0
    %197 = vmatpush1.msra.mxu0 0.0
    %198 = vmatprep.subr.mxu0 0.0
    %199 = vmatpush1.msra.mxu0 0.0
    %200 = vmatprep.subr.mxu0 0.0
    %201 = vmatpush1.msra.mxu0 0.0
    %202 = vmatprep.subr.mxu0 0.0
    %203 = vmatpush1.msra.mxu0 0.0
    %204 = vmatprep.subr.mxu0 0.0
    %205 = vmatpush1.msra.mxu0 0.0
    %206 = vmatprep.subr.mxu0 0.0
    %207 = vmatpush1.msra.mxu0 0.0
    %208 = vmatprep.mubr.f32.mxu0 0.0
    %209 = vmatmul.mubr.f32.gmra.mrb[0].mxu0 %v139
    %v210 = vpop.f32.mrb[0].mxu0
    %v211 = vadd.f32 0.0, %v210
    %v212 = vpop.f32.mrb[0].mxu0
    %213 = vmatprep.mubr.f32.mxu0 0.0
    %214 = vmatmul.mubr.f32.gmra.mrb[0].mxu0 %v142
    %v215 = vpop.f32.mrb[0].mxu0
    %v216 = vadd.f32 0.0, %v215
    %v217 = vpop.f32.mrb[0].mxu0
    %218 = vdwg.mxu0
    %v219 = vlaneseq
    %v220 = vshrl.u32 %v219, 7
    %vm221 = vcmp.le.s32.totalorder %v27, %v220
    %v222 = vsel %vm221, 0.0, -1e+30
    %v223 = vld [vmem:[%s5] sm:$0x1]
    %v225 = vlaneseq
    %v226 = vshrl.u32 %v225, 7
    %v227 = vsub.s32 0, %v226
    %v228 = vrot.slane %v223, %v227
    %231 = vrot.lane.b32.xlu0 %v211, 96
    %v232 = vpop.permute.xlu0 %231
    %vm233 = vcmask 64512
    %v234 = vsel %vm233, %v211, 0
    %v236 = vsel %vm233, %v232, 0
    %238 = vmatprep.subr.mxu0 0.0
    %239 = vmatpush1.xpose.msra.mxu0 %v236
    %240 = vmatprep.subr.mxu0 0.0
    %241 = vmatpush1.xpose.msra.mxu0 0.0
    %242 = vmatprep.subr.mxu0 0.0
    %243 = vmatpush1.xpose.msra.mxu0 0.0
    %244 = vmatprep.subr.mxu0 0.0
    %245 = vmatpush1.xpose.msra.mxu0 0.0
    %246 = vmatprep.subr.mxu0 0.0
    %247 = vmatpush1.xpose.msra.mxu0 0.0
    %248 = vmatprep.subr.mxu0 0.0
    %249 = vmatpush1.xpose.msra.mxu0 0.0
    %250 = vmatprep.subr.mxu0 0.0
    %251 = vmatpush1.xpose.msra.mxu0 0.0
    %252 = vmatprep.subr.mxu0 0.0
    %253 = vmatpush1.xpose.msra.mxu0 0.0
    %254 = vmatprep.subr.mxu0 0.0
    %255 = vmatpush1.xpose.msra.mxu0 0.0
    %256 = vmatprep.subr.mxu0 0.0
    %257 = vmatpush1.xpose.msra.mxu0 0.0
    %258 = vmatprep.subr.mxu0 0.0
    %259 = vmatpush1.xpose.msra.mxu0 0.0
    %260 = vmatprep.subr.mxu0 0.0
    %261 = vmatpush1.xpose.msra.mxu0 0.0
    %262 = vmatprep.subr.mxu0 0.0
    %263 = vmatpush1.xpose.msra.mxu0 0.0
    %264 = vmatprep.subr.mxu0 0.0
    %265 = vmatpush1.xpose.msra.mxu0 0.0
    %266 = vmatprep.subr.mxu0 0.0
    %267 = vmatpush1.xpose.msra.mxu0 0.0
    %268 = vmatprep.subr.mxu0 0.0
    %269 = vmatpush1.xpose.msra.mxu0 0.0
    %270 = vmatprep.subr.mxu0 0.0
    %271 = vmatpush1.xpose.msra.mxu0 0.0
    %272 = vmatprep.subr.mxu0 0.0
    %273 = vmatpush1.xpose.msra.mxu0 0.0
    %274 = vmatprep.subr.mxu0 0.0
    %275 = vmatpush1.xpose.msra.mxu0 0.0
    %276 = vmatprep.subr.mxu0 0.0
    %277 = vmatpush1.xpose.msra.mxu0 0.0
    %278 = vmatprep.subr.mxu0 0.0
    %279 = vmatpush1.xpose.msra.mxu0 0.0
    %280 = vmatprep.subr.mxu0 0.0
    %281 = vmatpush1.xpose.msra.mxu0 0.0
    %282 = vmatprep.subr.mxu0 0.0
    %283 = vmatpush1.xpose.msra.mxu0 0.0
    %284 = vmatprep.subr.mxu0 0.0
    %285 = vmatpush1.xpose.msra.mxu0 0.0
    %286 = vmatprep.subr.mxu0 0.0
    %287 = vmatpush1.xpose.msra.mxu0 0.0
    %288 = vmatprep.subr.mxu0 0.0
    %289 = vmatpush1.xpose.msra.mxu0 0.0
    %290 = vmatprep.subr.mxu0 0.0
    %291 = vmatpush1.xpose.msra.mxu0 0.0
    %292 = vmatprep.subr.mxu0 0.0
    %293 = vmatpush1.xpose.msra.mxu0 0.0
    %294 = vmatprep.subr.mxu0 0.0
    %295 = vmatpush1.xpose.msra.mxu0 0.0
    %296 = vmatprep.subr.mxu0 0.0
    %297 = vmatpush1.xpose.msra.mxu0 0.0
    %298 = vmatprep.subr.mxu0 0.0
    %299 = vmatpush1.xpose.msra.mxu0 0.0
    %300 = vmatprep.subr.mxu0 0.0
    %301 = vmatpush1.xpose.msra.mxu0 0.0
    %302 = vmatprep.mubr.f32.mxu0 0.0
    %303 = vmatmul.mubr.f32.gmra.mrb[0].mxu0 %v234
    %v304 = vpop.f32.mrb[0].mxu0
    %v305 = vadd.f32 %v222, %v304
    %v306 = vpop.f32.mrb[0].mxu0
    %307 = vdwg.mxu0
    %309 = vrot.lane.b32.xlu0 %v216, 96
    %v310 = vpop.permute.xlu0 %309
    %v311 = vsel %vm233, %v216, 0
    %v313 = vsel %vm233, %v310, 0
    %315 = vmatprep.subr.mxu0 0.0
    %316 = vmatpush1.xpose.msra.mxu0 %v313
    %317 = vmatprep.subr.mxu0 0.0
    %318 = vmatpush1.xpose.msra.mxu0 0.0
    %319 = vmatprep.subr.mxu0 0.0
    %320 = vmatpush1.xpose.msra.mxu0 0.0
    %321 = vmatprep.subr.mxu0 0.0
    %322 = vmatpush1.xpose.msra.mxu0 0.0
    %323 = vmatprep.subr.mxu0 0.0
    %324 = vmatpush1.xpose.msra.mxu0 0.0
    %325 = vmatprep.subr.mxu0 0.0
    %326 = vmatpush1.xpose.msra.mxu0 0.0
    %327 = vmatprep.subr.mxu0 0.0
    %328 = vmatpush1.xpose.msra.mxu0 0.0
    %329 = vmatprep.subr.mxu0 0.0
    %330 = vmatpush1.xpose.msra.mxu0 0.0
    %331 = vmatprep.subr.mxu0 0.0
    %332 = vmatpush1.xpose.msra.mxu0 0.0
    %333 = vmatprep.subr.mxu0 0.0
    %334 = vmatpush1.xpose.msra.mxu0 0.0
    %335 = vmatprep.subr.mxu0 0.0
    %336 = vmatpush1.xpose.msra.mxu0 0.0
    %337 = vmatprep.subr.mxu0 0.0
    %338 = vmatpush1.xpose.msra.mxu0 0.0
    %339 = vmatprep.subr.mxu0 0.0
    %340 = vmatpush1.xpose.msra.mxu0 0.0
    %341 = vmatprep.subr.mxu0 0.0
    %342 = vmatpush1.xpose.msra.mxu0 0.0
    %343 = vmatprep.subr.mxu0 0.0
    %344 = vmatpush1.xpose.msra.mxu0 0.0
    %345 = vmatprep.subr.mxu0 0.0
    %346 = vmatpush1.xpose.msra.mxu0 0.0
    %347 = vmatprep.subr.mxu0 0.0
    %348 = vmatpush1.xpose.msra.mxu0 0.0
    %349 = vmatprep.subr.mxu0 0.0
    %350 = vmatpush1.xpose.msra.mxu0 0.0
    %351 = vmatprep.subr.mxu0 0.0
    %352 = vmatpush1.xpose.msra.mxu0 0.0
    %353 = vmatprep.subr.mxu0 0.0
    %354 = vmatpush1.xpose.msra.mxu0 0.0
    %355 = vmatprep.subr.mxu0 0.0
    %356 = vmatpush1.xpose.msra.mxu0 0.0
    %357 = vmatprep.subr.mxu0 0.0
    %358 = vmatpush1.xpose.msra.mxu0 0.0
    %359 = vmatprep.subr.mxu0 0.0
    %360 = vmatpush1.xpose.msra.mxu0 0.0
    %361 = vmatprep.subr.mxu0 0.0
    %362 = vmatpush1.xpose.msra.mxu0 0.0
    %363 = vmatprep.subr.mxu0 0.0
    %364 = vmatpush1.xpose.msra.mxu0 0.0
    %365 = vmatprep.subr.mxu0 0.0
    %366 = vmatpush1.xpose.msra.mxu0 0.0
    %367 = vmatprep.subr.mxu0 0.0
    %368 = vmatpush1.xpose.msra.mxu0 0.0
    %369 = vmatprep.subr.mxu0 0.0
    %370 = vmatpush1.xpose.msra.mxu0 0.0
    %371 = vmatprep.subr.mxu0 0.0
    %372 = vmatpush1.xpose.msra.mxu0 0.0
    %373 = vmatprep.subr.mxu0 0.0
    %374 = vmatpush1.xpose.msra.mxu0 0.0
    %375 = vmatprep.subr.mxu0 0.0
    %376 = vmatpush1.xpose.msra.mxu0 0.0
    %377 = vmatprep.subr.mxu0 0.0
    %378 = vmatpush1.xpose.msra.mxu0 0.0
    %379 = vmatprep.mubr.f32.mxu0 0.0
    %380 = vmatmul.mubr.f32.gmra.mrb[0].mxu0 %v311
    %v381 = vpop.f32.mrb[0].mxu0
    %v382 = vadd.f32 %v222, %v381
    %v383 = vpop.f32.mrb[0].mxu0
    %384 = vdwg.mxu0
    %v385 = vsel %vm233, %v305, -inf
    %386 = vmax.xlane.f32.xlu0 %v385
    %v387 = vpop.xlane.xlu0 %386
    %v388 = vsel %vm233, %v382, -inf
    %389 = vmax.xlane.f32.xlu0 %v388
    %v390 = vpop.xlane.xlu0 %389
    %v391 = vsub.f32 %v305, %v387
    %v392 = vsub.f32 %v382, %v390
    %v393 = vmul.f32 %v391, 1.442695
    %v394 = vpow.pop %v393
    %v395 = vmul.f32 %v392, 1.442695
    %v396 = vpow.pop %v395
    %v397 = vsel %vm233, %v394, 0.0
    %398 = vadd.xlane.f32.xlu0 %v397
    %v399 = vpop.xlane.xlu0 %398
    %v400 = vsel %vm233, %v396, 0.0
    %401 = vadd.xlane.f32.xlu0 %v400
    %v402 = vpop.xlane.xlu0 %401
    %403 = vrot.lane.b32.xlu0 %v211, 64
    %v404 = vpop.permute.xlu0 %403
    %v407 = vsel %vm233, %v394, 0
    %409 = vmatprep.subr.mxu0 0.0
    %410 = vmatpush1.msra.mxu0 %v404
    %411 = vmatprep.subr.mxu0 0.0
    %412 = vmatpush1.msra.mxu0 0.0
    %413 = vmatprep.subr.mxu0 0.0
    %414 = vmatpush1.msra.mxu0 0.0
    %415 = vmatprep.subr.mxu0 0.0
    %416 = vmatpush1.msra.mxu0 0.0
    %417 = vmatprep.subr.mxu0 0.0
    %418 = vmatpush1.msra.mxu0 0.0
    %419 = vmatprep.subr.mxu0 0.0
    %420 = vmatpush1.msra.mxu0 0.0
    %421 = vmatprep.subr.mxu0 0.0
    %422 = vmatpush1.msra.mxu0 0.0
    %423 = vmatprep.subr.mxu0 0.0
    %424 = vmatpush1.msra.mxu0 0.0
    %425 = vmatprep.subr.mxu0 0.0
    %426 = vmatpush1.msra.mxu0 0.0
    %427 = vmatprep.subr.mxu0 0.0
    %428 = vmatpush1.msra.mxu0 0.0
    %429 = vmatprep.subr.mxu0 0.0
    %430 = vmatpush1.msra.mxu0 0.0
    %431 = vmatprep.subr.mxu0 0.0
    %432 = vmatpush1.msra.mxu0 0.0
    %433 = vmatprep.subr.mxu0 0.0
    %434 = vmatpush1.msra.mxu0 0.0
    %435 = vmatprep.subr.mxu0 0.0
    %436 = vmatpush1.msra.mxu0 0.0
    %437 = vmatprep.subr.mxu0 0.0
    %438 = vmatpush1.msra.mxu0 0.0
    %439 = vmatprep.subr.mxu0 0.0
    %440 = vmatpush1.msra.mxu0 0.0
    %441 = vmatprep.subr.mxu0 0.0
    %442 = vmatpush1.msra.mxu0 0.0
    %443 = vmatprep.subr.mxu0 0.0
    %444 = vmatpush1.msra.mxu0 0.0
    %445 = vmatprep.subr.mxu0 0.0
    %446 = vmatpush1.msra.mxu0 0.0
    %447 = vmatprep.subr.mxu0 0.0
    %448 = vmatpush1.msra.mxu0 0.0
    %449 = vmatprep.subr.mxu0 0.0
    %450 = vmatpush1.msra.mxu0 0.0
    %451 = vmatprep.subr.mxu0 0.0
    %452 = vmatpush1.msra.mxu0 0.0
    %453 = vmatprep.subr.mxu0 0.0
    %454 = vmatpush1.msra.mxu0 0.0
    %455 = vmatprep.subr.mxu0 0.0
    %456 = vmatpush1.msra.mxu0 0.0
    %457 = vmatprep.subr.mxu0 0.0
    %458 = vmatpush1.msra.mxu0 0.0
    %459 = vmatprep.subr.mxu0 0.0
    %460 = vmatpush1.msra.mxu0 0.0
    %461 = vmatprep.subr.mxu0 0.0
    %462 = vmatpush1.msra.mxu0 0.0
    %463 = vmatprep.subr.mxu0 0.0
    %464 = vmatpush1.msra.mxu0 0.0
    %465 = vmatprep.subr.mxu0 0.0
    %466 = vmatpush1.msra.mxu0 0.0
    %467 = vmatprep.subr.mxu0 0.0
    %468 = vmatpush1.msra.mxu0 0.0
    %469 = vmatprep.subr.mxu0 0.0
    %470 = vmatpush1.msra.mxu0 0.0
    %471 = vmatprep.subr.mxu0 0.0
    %472 = vmatpush1.msra.mxu0 0.0
    %473 = vmatprep.mubr.f32.mxu0 0.0
    %474 = vmatmul.mubr.f32.gmra.mrb[0].mxu0 %v407
    %v475 = vpop.f32.mrb[0].mxu0
    %v476 = vadd.f32 0.0, %v475
    %v477 = vpop.f32.mrb[0].mxu0
    %478 = vdwg.mxu0
    %479 = vrot.lane.b32.xlu0 %v216, 64
    %v480 = vpop.permute.xlu0 %479
    %v483 = vsel %vm233, %v396, 0
    %485 = vmatprep.subr.mxu0 0.0
    %486 = vmatpush1.msra.mxu0 %v480
    %487 = vmatprep.subr.mxu0 0.0
    %488 = vmatpush1.msra.mxu0 0.0
    %489 = vmatprep.subr.mxu0 0.0
    %490 = vmatpush1.msra.mxu0 0.0
    %491 = vmatprep.subr.mxu0 0.0
    %492 = vmatpush1.msra.mxu0 0.0
    %493 = vmatprep.subr.mxu0 0.0
    %494 = vmatpush1.msra.mxu0 0.0
    %495 = vmatprep.subr.mxu0 0.0
    %496 = vmatpush1.msra.mxu0 0.0
    %497 = vmatprep.subr.mxu0 0.0
    %498 = vmatpush1.msra.mxu0 0.0
    %499 = vmatprep.subr.mxu0 0.0
    %500 = vmatpush1.msra.mxu0 0.0
    %501 = vmatprep.subr.mxu0 0.0
    %502 = vmatpush1.msra.mxu0 0.0
    %503 = vmatprep.subr.mxu0 0.0
    %504 = vmatpush1.msra.mxu0 0.0
    %505 = vmatprep.subr.mxu0 0.0
    %506 = vmatpush1.msra.mxu0 0.0
    %507 = vmatprep.subr.mxu0 0.0
    %508 = vmatpush1.msra.mxu0 0.0
    %509 = vmatprep.subr.mxu0 0.0
    %510 = vmatpush1.msra.mxu0 0.0
    %511 = vmatprep.subr.mxu0 0.0
    %512 = vmatpush1.msra.mxu0 0.0
    %513 = vmatprep.subr.mxu0 0.0
    %514 = vmatpush1.msra.mxu0 0.0
    %515 = vmatprep.subr.mxu0 0.0
    %516 = vmatpush1.msra.mxu0 0.0
    %517 = vmatprep.subr.mxu0 0.0
    %518 = vmatpush1.msra.mxu0 0.0
    %519 = vmatprep.subr.mxu0 0.0
    %520 = vmatpush1.msra.mxu0 0.0
    %521 = vmatprep.subr.mxu0 0.0
    %522 = vmatpush1.msra.mxu0 0.0
    %523 = vmatprep.subr.mxu0 0.0
    %524 = vmatpush1.msra.mxu0 0.0
    %525 = vmatprep.subr.mxu0 0.0
    %526 = vmatpush1.msra.mxu0 0.0
    %527 = vmatprep.subr.mxu0 0.0
    %528 = vmatpush1.msra.mxu0 0.0
    %529 = vmatprep.subr.mxu0 0.0
    %530 = vmatpush1.msra.mxu0 0.0
    %531 = vmatprep.subr.mxu0 0.0
    %532 = vmatpush1.msra.mxu0 0.0
    %533 = vmatprep.subr.mxu0 0.0
    %534 = vmatpush1.msra.mxu0 0.0
    %535 = vmatprep.subr.mxu0 0.0
    %536 = vmatpush1.msra.mxu0 0.0
    %537 = vmatprep.subr.mxu0 0.0
    %538 = vmatpush1.msra.mxu0 0.0
    %539 = vmatprep.subr.mxu0 0.0
    %540 = vmatpush1.msra.mxu0 0.0
    %541 = vmatprep.subr.mxu0 0.0
    %542 = vmatpush1.msra.mxu0 0.0
    %543 = vmatprep.subr.mxu0 0.0
    %544 = vmatpush1.msra.mxu0 0.0
    %545 = vmatprep.subr.mxu0 0.0
    %546 = vmatpush1.msra.mxu0 0.0
    %547 = vmatprep.subr.mxu0 0.0
    %548 = vmatpush1.msra.mxu0 0.0
    %549 = vmatprep.mubr.f32.mxu0 0.0
    %550 = vmatmul.mubr.f32.gmra.mrb[0].mxu0 %v483
    %v551 = vpop.f32.mrb[0].mxu0
    %v552 = vadd.f32 0.0, %v551
    %v553 = vpop.f32.mrb[0].mxu0
    %554 = vdwg.mxu0
    %v555 = vrcp.pop %v399
    %v556 = vrcp.pop %v402
    %v557 = vmul.f32 %v476, %v555
    %v558 = vmul.f32 %v552, %v556
    %v559 = vld [vmem:[%s4] sm:$0xff]
    %v561 = vsel %vm233, %v557, 0
    %v564 = vsel %vm233, %v558, 0
    %566 = vmatprep.subr.mxu0 0.0
    %567 = vmatpush1.msra.mxu0 %v559
    %568 = vmatprep.subr.mxu0 0.0
    %569 = vmatpush1.msra.mxu0 0.0
    %570 = vmatprep.subr.mxu0 0.0
    %571 = vmatpush1.msra.mxu0 0.0
    %572 = vmatprep.subr.mxu0 0.0
    %573 = vmatpush1.msra.mxu0 0.0
    %574 = vmatprep.subr.mxu0 0.0
    %575 = vmatpush1.msra.mxu0 0.0
    %576 = vmatprep.subr.mxu0 0.0
    %577 = vmatpush1.msra.mxu0 0.0
    %578 = vmatprep.subr.mxu0 0.0
    %579 = vmatpush1.msra.mxu0 0.0
    %580 = vmatprep.subr.mxu0 0.0
    %581 = vmatpush1.msra.mxu0 0.0
    %582 = vmatprep.subr.mxu0 0.0
    %583 = vmatpush1.msra.mxu0 0.0
    %584 = vmatprep.subr.mxu0 0.0
    %585 = vmatpush1.msra.mxu0 0.0
    %586 = vmatprep.subr.mxu0 0.0
    %587 = vmatpush1.msra.mxu0 0.0
    %588 = vmatprep.subr.mxu0 0.0
    %589 = vmatpush1.msra.mxu0 0.0
    %590 = vmatprep.subr.mxu0 0.0
    %591 = vmatpush1.msra.mxu0 0.0
    %592 = vmatprep.subr.mxu0 0.0
    %593 = vmatpush1.msra.mxu0 0.0
    %594 = vmatprep.subr.mxu0 0.0
    %595 = vmatpush1.msra.mxu0 0.0
    %596 = vmatprep.subr.mxu0 0.0
    %597 = vmatpush1.msra.mxu0 0.0
    %598 = vmatprep.subr.mxu0 0.0
    %599 = vmatpush1.msra.mxu0 0.0
    %600 = vmatprep.subr.mxu0 0.0
    %601 = vmatpush1.msra.mxu0 0.0
    %602 = vmatprep.subr.mxu0 0.0
    %603 = vmatpush1.msra.mxu0 0.0
    %604 = vmatprep.subr.mxu0 0.0
    %605 = vmatpush1.msra.mxu0 0.0
    %606 = vmatprep.subr.mxu0 0.0
    %607 = vmatpush1.msra.mxu0 0.0
    %608 = vmatprep.subr.mxu0 0.0
    %609 = vmatpush1.msra.mxu0 0.0
    %610 = vmatprep.subr.mxu0 0.0
    %611 = vmatpush1.msra.mxu0 0.0
    %612 = vmatprep.subr.mxu0 0.0
    %613 = vmatpush1.msra.mxu0 0.0
    %614 = vmatprep.subr.mxu0 0.0
    %615 = vmatpush1.msra.mxu0 0.0
    %616 = vmatprep.subr.mxu0 0.0
    %617 = vmatpush1.msra.mxu0 0.0
    %618 = vmatprep.subr.mxu0 0.0
    %619 = vmatpush1.msra.mxu0 0.0
    %620 = vmatprep.subr.mxu0 0.0
    %621 = vmatpush1.msra.mxu0 0.0
    %622 = vmatprep.subr.mxu0 0.0
    %623 = vmatpush1.msra.mxu0 0.0
    %624 = vmatprep.subr.mxu0 0.0
    %625 = vmatpush1.msra.mxu0 0.0
    %626 = vmatprep.subr.mxu0 0.0
    %627 = vmatpush1.msra.mxu0 0.0
    %628 = vmatprep.subr.mxu0 0.0
    %629 = vmatpush1.msra.mxu0 0.0
    %630 = vmatprep.mubr.f32.mxu0 0.0
    %631 = vmatmul.mubr.f32.gmra.mrb[0].mxu0 %v561
    %v632 = vpop.f32.mrb[0].mxu0
    %v633 = vadd.f32 0.0, %v632
    %v634 = vpop.f32.mrb[0].mxu0
    %635 = vmatprep.mubr.f32.mxu0 0.0
    %636 = vmatmul.mubr.f32.gmra.mrb[0].mxu0 %v564
    %v637 = vpop.f32.mrb[0].mxu0
    %v638 = vadd.f32 0.0, %v637
    %v639 = vpop.f32.mrb[0].mxu0
    %640 = vdwg.mxu0
    %v641 = vadd.f32 %v228, %v633
    %v642 = vadd.f32 %v228, %v638
    %643 = vrot.lane.b32.xlu0 %v211, 120
    %v644 = vpop.permute.xlu0 %643
    %645 = vrot.lane.b32.xlu0 %v211, 88
    %v646 = vpop.permute.xlu0 %645
    %v647 = vsel %vm233, %v644, 0
    %v649 = vsel %vm233, %v646, 0
    %651 = vmatprep.subr.mxu0 0.0
    %652 = vmatpush1.xpose.msra.mxu0 %v649
    %653 = vmatprep.subr.mxu0 0.0
    %654 = vmatpush1.xpose.msra.mxu0 0.0
    %655 = vmatprep.subr.mxu0 0.0
    %656 = vmatpush1.xpose.msra.mxu0 0.0
    %657 = vmatprep.subr.mxu0 0.0
    %658 = vmatpush1.xpose.msra.mxu0 0.0
    %659 = vmatprep.subr.mxu0 0.0
    %660 = vmatpush1.xpose.msra.mxu0 0.0
    %661 = vmatprep.subr.mxu0 0.0
    %662 = vmatpush1.xpose.msra.mxu0 0.0
    %663 = vmatprep.subr.mxu0 0.0
    %664 = vmatpush1.xpose.msra.mxu0 0.0
    %665 = vmatprep.subr.mxu0 0.0
    %666 = vmatpush1.xpose.msra.mxu0 0.0
    %667 = vmatprep.subr.mxu0 0.0
    %668 = vmatpush1.xpose.msra.mxu0 0.0
    %669 = vmatprep.subr.mxu0 0.0
    %670 = vmatpush1.xpose.msra.mxu0 0.0
    %671 = vmatprep.subr.mxu0 0.0
    %672 = vmatpush1.xpose.msra.mxu0 0.0
    %673 = vmatprep.subr.mxu0 0.0
    %674 = vmatpush1.xpose.msra.mxu0 0.0
    %675 = vmatprep.subr.mxu0 0.0
    %676 = vmatpush1.xpose.msra.mxu0 0.0
    %677 = vmatprep.subr.mxu0 0.0
    %678 = vmatpush1.xpose.msra.mxu0 0.0
    %679 = vmatprep.subr.mxu0 0.0
    %680 = vmatpush1.xpose.msra.mxu0 0.0
    %681 = vmatprep.subr.mxu0 0.0
    %682 = vmatpush1.xpose.msra.mxu0 0.0
    %683 = vmatprep.subr.mxu0 0.0
    %684 = vmatpush1.xpose.msra.mxu0 0.0
    %685 = vmatprep.subr.mxu0 0.0
    %686 = vmatpush1.xpose.msra.mxu0 0.0
    %687 = vmatprep.subr.mxu0 0.0
    %688 = vmatpush1.xpose.msra.mxu0 0.0
    %689 = vmatprep.subr.mxu0 0.0
    %690 = vmatpush1.xpose.msra.mxu0 0.0
    %691 = vmatprep.subr.mxu0 0.0
    %692 = vmatpush1.xpose.msra.mxu0 0.0
    %693 = vmatprep.subr.mxu0 0.0
    %694 = vmatpush1.xpose.msra.mxu0 0.0
    %695 = vmatprep.subr.mxu0 0.0
    %696 = vmatpush1.xpose.msra.mxu0 0.0
    %697 = vmatprep.subr.mxu0 0.0
    %698 = vmatpush1.xpose.msra.mxu0 0.0
    %699 = vmatprep.subr.mxu0 0.0
    %700 = vmatpush1.xpose.msra.mxu0 0.0
    %701 = vmatprep.subr.mxu0 0.0
    %702 = vmatpush1.xpose.msra.mxu0 0.0
    %703 = vmatprep.subr.mxu0 0.0
    %704 = vmatpush1.xpose.msra.mxu0 0.0
    %705 = vmatprep.subr.mxu0 0.0
    %706 = vmatpush1.xpose.msra.mxu0 0.0
    %707 = vmatprep.subr.mxu0 0.0
    %708 = vmatpush1.xpose.msra.mxu0 0.0
    %709 = vmatprep.subr.mxu0 0.0
    %710 = vmatpush1.xpose.msra.mxu0 0.0
    %711 = vmatprep.subr.mxu0 0.0
    %712 = vmatpush1.xpose.msra.mxu0 0.0
    %713 = vmatprep.subr.mxu0 0.0
    %714 = vmatpush1.xpose.msra.mxu0 0.0
    %715 = vmatprep.mubr.f32.mxu0 0.0
    %716 = vmatmul.mubr.f32.gmra.mrb[0].mxu0 %v647
    %v717 = vpop.f32.mrb[0].mxu0
    %v718 = vadd.f32 %v222, %v717
    %v719 = vpop.f32.mrb[0].mxu0
    %720 = vdwg.mxu0
    %721 = vrot.lane.b32.xlu0 %v216, 120
    %v722 = vpop.permute.xlu0 %721
    %723 = vrot.lane.b32.xlu0 %v216, 88
    %v724 = vpop.permute.xlu0 %723
    %v725 = vsel %vm233, %v722, 0
    %v727 = vsel %vm233, %v724, 0
    %729 = vmatprep.subr.mxu0 0.0
    %730 = vmatpush1.xpose.msra.mxu0 %v727
    %731 = vmatprep.subr.mxu0 0.0
    %732 = vmatpush1.xpose.msra.mxu0 0.0
    %733 = vmatprep.subr.mxu0 0.0
    %734 = vmatpush1.xpose.msra.mxu0 0.0
    %735 = vmatprep.subr.mxu0 0.0
    %736 = vmatpush1.xpose.msra.mxu0 0.0
    %737 = vmatprep.subr.mxu0 0.0
    %738 = vmatpush1.xpose.msra.mxu0 0.0
    %739 = vmatprep.subr.mxu0 0.0
    %740 = vmatpush1.xpose.msra.mxu0 0.0
    %741 = vmatprep.subr.mxu0 0.0
    %742 = vmatpush1.xpose.msra.mxu0 0.0
    %743 = vmatprep.subr.mxu0 0.0
    %744 = vmatpush1.xpose.msra.mxu0 0.0
    %745 = vmatprep.subr.mxu0 0.0
    %746 = vmatpush1.xpose.msra.mxu0 0.0
    %747 = vmatprep.subr.mxu0 0.0
    %748 = vmatpush1.xpose.msra.mxu0 0.0
    %749 = vmatprep.subr.mxu0 0.0
    %750 = vmatpush1.xpose.msra.mxu0 0.0
    %751 = vmatprep.subr.mxu0 0.0
    %752 = vmatpush1.xpose.msra.mxu0 0.0
    %753 = vmatprep.subr.mxu0 0.0
    %754 = vmatpush1.xpose.msra.mxu0 0.0
    %755 = vmatprep.subr.mxu0 0.0
    %756 = vmatpush1.xpose.msra.mxu0 0.0
    %757 = vmatprep.subr.mxu0 0.0
    %758 = vmatpush1.xpose.msra.mxu0 0.0
    %759 = vmatprep.subr.mxu0 0.0
    %760 = vmatpush1.xpose.msra.mxu0 0.0
    %761 = vmatprep.subr.mxu0 0.0
    %762 = vmatpush1.xpose.msra.mxu0 0.0
    %763 = vmatprep.subr.mxu0 0.0
    %764 = vmatpush1.xpose.msra.mxu0 0.0
    %765 = vmatprep.subr.mxu0 0.0
    %766 = vmatpush1.xpose.msra.mxu0 0.0
    %767 = vmatprep.subr.mxu0 0.0
    %768 = vmatpush1.xpose.msra.mxu0 0.0
    %769 = vmatprep.subr.mxu0 0.0
    %770 = vmatpush1.xpose.msra.mxu0 0.0
    %771 = vmatprep.subr.mxu0 0.0
    %772 = vmatpush1.xpose.msra.mxu0 0.0
    %773 = vmatprep.subr.mxu0 0.0
    %774 = vmatpush1.xpose.msra.mxu0 0.0
    %775 = vmatprep.subr.mxu0 0.0
    %776 = vmatpush1.xpose.msra.mxu0 0.0
    %777 = vmatprep.subr.mxu0 0.0
    %778 = vmatpush1.xpose.msra.mxu0 0.0
    %779 = vmatprep.subr.mxu0 0.0
    %780 = vmatpush1.xpose.msra.mxu0 0.0
    %781 = vmatprep.subr.mxu0 0.0
    %782 = vmatpush1.xpose.msra.mxu0 0.0
    %783 = vmatprep.subr.mxu0 0.0
    %784 = vmatpush1.xpose.msra.mxu0 0.0
    %785 = vmatprep.subr.mxu0 0.0
    %786 = vmatpush1.xpose.msra.mxu0 0.0
    %787 = vmatprep.subr.mxu0 0.0
    %788 = vmatpush1.xpose.msra.mxu0 0.0
    %789 = vmatprep.subr.mxu0 0.0
    %790 = vmatpush1.xpose.msra.mxu0 0.0
    %791 = vmatprep.subr.mxu0 0.0
    %792 = vmatpush1.xpose.msra.mxu0 0.0
    %793 = vmatprep.mubr.f32.mxu0 0.0
    %794 = vmatmul.mubr.f32.gmra.mrb[0].mxu0 %v725
    %v795 = vpop.f32.mrb[0].mxu0
    %v796 = vadd.f32 %v222, %v795
    %v797 = vpop.f32.mrb[0].mxu0
    %798 = vdwg.mxu0
    %v799 = vsel %vm233, %v718, -inf
    %800 = vmax.xlane.f32.xlu0 %v799
    %v801 = vpop.xlane.xlu0 %800
    %v802 = vsel %vm233, %v796, -inf
    %803 = vmax.xlane.f32.xlu0 %v802
    %v804 = vpop.xlane.xlu0 %803
    %v805 = vsub.f32 %v718, %v801
    %v806 = vsub.f32 %v796, %v804
    %v807 = vmul.f32 %v805, 1.442695
    %v808 = vpow.pop %v807
    %v809 = vmul.f32 %v806, 1.442695
    %v810 = vpow.pop %v809
    %v811 = vsel %vm233, %v808, 0.0
    %812 = vadd.xlane.f32.xlu0 %v811
    %v813 = vpop.xlane.xlu0 %812
    %v814 = vsel %vm233, %v810, 0.0
    %815 = vadd.xlane.f32.xlu0 %v814
    %v816 = vpop.xlane.xlu0 %815
    %817 = vrot.lane.b32.xlu0 %v211, 56
    %v818 = vpop.permute.xlu0 %817
    %v821 = vsel %vm233, %v808, 0
    %823 = vmatprep.subr.mxu0 0.0
    %824 = vmatpush1.msra.mxu0 %v818
    %825 = vmatprep.subr.mxu0 0.0
    %826 = vmatpush1.msra.mxu0 0.0
    %827 = vmatprep.subr.mxu0 0.0
    %828 = vmatpush1.msra.mxu0 0.0
    %829 = vmatprep.subr.mxu0 0.0
    %830 = vmatpush1.msra.mxu0 0.0
    %831 = vmatprep.subr.mxu0 0.0
    %832 = vmatpush1.msra.mxu0 0.0
    %833 = vmatprep.subr.mxu0 0.0
    %834 = vmatpush1.msra.mxu0 0.0
    %835 = vmatprep.subr.mxu0 0.0
    %836 = vmatpush1.msra.mxu0 0.0
    %837 = vmatprep.subr.mxu0 0.0
    %838 = vmatpush1.msra.mxu0 0.0
    %839 = vmatprep.subr.mxu0 0.0
    %840 = vmatpush1.msra.mxu0 0.0
    %841 = vmatprep.subr.mxu0 0.0
    %842 = vmatpush1.msra.mxu0 0.0
    %843 = vmatprep.subr.mxu0 0.0
    %844 = vmatpush1.msra.mxu0 0.0
    %845 = vmatprep.subr.mxu0 0.0
    %846 = vmatpush1.msra.mxu0 0.0
    %847 = vmatprep.subr.mxu0 0.0
    %848 = vmatpush1.msra.mxu0 0.0
    %849 = vmatprep.subr.mxu0 0.0
    %850 = vmatpush1.msra.mxu0 0.0
    %851 = vmatprep.subr.mxu0 0.0
    %852 = vmatpush1.msra.mxu0 0.0
    %853 = vmatprep.subr.mxu0 0.0
    %854 = vmatpush1.msra.mxu0 0.0
    %855 = vmatprep.subr.mxu0 0.0
    %856 = vmatpush1.msra.mxu0 0.0
    %857 = vmatprep.subr.mxu0 0.0
    %858 = vmatpush1.msra.mxu0 0.0
    %859 = vmatprep.subr.mxu0 0.0
    %860 = vmatpush1.msra.mxu0 0.0
    %861 = vmatprep.subr.mxu0 0.0
    %862 = vmatpush1.msra.mxu0 0.0
    %863 = vmatprep.subr.mxu0 0.0
    %864 = vmatpush1.msra.mxu0 0.0
    %865 = vmatprep.subr.mxu0 0.0
    %866 = vmatpush1.msra.mxu0 0.0
    %867 = vmatprep.subr.mxu0 0.0
    %868 = vmatpush1.msra.mxu0 0.0
    %869 = vmatprep.subr.mxu0 0.0
    %870 = vmatpush1.msra.mxu0 0.0
    %871 = vmatprep.subr.mxu0 0.0
    %872 = vmatpush1.msra.mxu0 0.0
    %873 = vmatprep.subr.mxu0 0.0
    %874 = vmatpush1.msra.mxu0 0.0
    %875 = vmatprep.subr.mxu0 0.0
    %876 = vmatpush1.msra.mxu0 0.0
    %877 = vmatprep.subr.mxu0 0.0
    %878 = vmatpush1.msra.mxu0 0.0
    %879 = vmatprep.subr.mxu0 0.0
    %880 = vmatpush1.msra.mxu0 0.0
    %881 = vmatprep.subr.mxu0 0.0
    %882 = vmatpush1.msra.mxu0 0.0
    %883 = vmatprep.subr.mxu0 0.0
    %884 = vmatpush1.msra.mxu0 0.0
    %885 = vmatprep.subr.mxu0 0.0
    %886 = vmatpush1.msra.mxu0 0.0
    %887 = vmatprep.mubr.f32.mxu0 0.0
    %888 = vmatmul.mubr.f32.gmra.mrb[0].mxu0 %v821
    %v889 = vpop.f32.mrb[0].mxu0
    %v890 = vadd.f32 0.0, %v889
    %v891 = vpop.f32.mrb[0].mxu0
    %892 = vdwg.mxu0
    %893 = vrot.lane.b32.xlu0 %v216, 56
    %v894 = vpop.permute.xlu0 %893
    %v897 = vsel %vm233, %v810, 0
    %899 = vmatprep.subr.mxu0 0.0
    %900 = vmatpush1.msra.mxu0 %v894
    %901 = vmatprep.subr.mxu0 0.0
    %902 = vmatpush1.msra.mxu0 0.0
    %903 = vmatprep.subr.mxu0 0.0
    %904 = vmatpush1.msra.mxu0 0.0
    %905 = vmatprep.subr.mxu0 0.0
    %906 = vmatpush1.msra.mxu0 0.0
    %907 = vmatprep.subr.mxu0 0.0
    %908 = vmatpush1.msra.mxu0 0.0
    %909 = vmatprep.subr.mxu0 0.0
    %910 = vmatpush1.msra.mxu0 0.0
    %911 = vmatprep.subr.mxu0 0.0
    %912 = vmatpush1.msra.mxu0 0.0
    %913 = vmatprep.subr.mxu0 0.0
    %914 = vmatpush1.msra.mxu0 0.0
    %915 = vmatprep.subr.mxu0 0.0
    %916 = vmatpush1.msra.mxu0 0.0
    %917 = vmatprep.subr.mxu0 0.0
    %918 = vmatpush1.msra.mxu0 0.0
    %919 = vmatprep.subr.mxu0 0.0
    %920 = vmatpush1.msra.mxu0 0.0
    %921 = vmatprep.subr.mxu0 0.0
    %922 = vmatpush1.msra.mxu0 0.0
    %923 = vmatprep.subr.mxu0 0.0
    %924 = vmatpush1.msra.mxu0 0.0
    %925 = vmatprep.subr.mxu0 0.0
    %926 = vmatpush1.msra.mxu0 0.0
    %927 = vmatprep.subr.mxu0 0.0
    %928 = vmatpush1.msra.mxu0 0.0
    %929 = vmatprep.subr.mxu0 0.0
    %930 = vmatpush1.msra.mxu0 0.0
    %931 = vmatprep.subr.mxu0 0.0
    %932 = vmatpush1.msra.mxu0 0.0
    %933 = vmatprep.subr.mxu0 0.0
    %934 = vmatpush1.msra.mxu0 0.0
    %935 = vmatprep.subr.mxu0 0.0
    %936 = vmatpush1.msra.mxu0 0.0
    %937 = vmatprep.subr.mxu0 0.0
    %938 = vmatpush1.msra.mxu0 0.0
    %939 = vmatprep.subr.mxu0 0.0
    %940 = vmatpush1.msra.mxu0 0.0
    %941 = vmatprep.subr.mxu0 0.0
    %942 = vmatpush1.msra.mxu0 0.0
    %943 = vmatprep.subr.mxu0 0.0
    %944 = vmatpush1.msra.mxu0 0.0
    %945 = vmatprep.subr.mxu0 0.0
    %946 = vmatpush1.msra.mxu0 0.0
    %947 = vmatprep.subr.mxu0 0.0
    %948 = vmatpush1.msra.mxu0 0.0
    %949 = vmatprep.subr.mxu0 0.0
    %950 = vmatpush1.msra.mxu0 0.0
    %951 = vmatprep.subr.mxu0 0.0
    %952 = vmatpush1.msra.mxu0 0.0
    %953 = vmatprep.subr.mxu0 0.0
    %954 = vmatpush1.msra.mxu0 0.0
    %955 = vmatprep.subr.mxu0 0.0
    %956 = vmatpush1.msra.mxu0 0.0
    %957 = vmatprep.subr.mxu0 0.0
    %958 = vmatpush1.msra.mxu0 0.0
    %959 = vmatprep.subr.mxu0 0.0
    %960 = vmatpush1.msra.mxu0 0.0
    %961 = vmatprep.subr.mxu0 0.0
    %962 = vmatpush1.msra.mxu0 0.0
    %963 = vmatprep.mubr.f32.mxu0 0.0
    %964 = vmatmul.mubr.f32.gmra.mrb[0].mxu0 %v897
    %v965 = vpop.f32.mrb[0].mxu0
    %v966 = vadd.f32 0.0, %v965
    %v967 = vpop.f32.mrb[0].mxu0
    %968 = vdwg.mxu0
    %v969 = vrcp.pop %v813
    %v970 = vrcp.pop %v816
    %v971 = vmul.f32 %v890, %v969
    %v972 = vmul.f32 %v966, %v970
    %s973 = scalar_lea.vmem %s4, 8
    %v974 = vld [vmem:[%s973] sm:$0xff]
    %v976 = vsel %vm233, %v971, 0
    %v979 = vsel %vm233, %v972, 0
    %981 = vmatprep.subr.mxu0 0.0
    %982 = vmatpush1.msra.mxu0 %v974
    %983 = vmatprep.subr.mxu0 0.0
    %984 = vmatpush1.msra.mxu0 0.0
    %985 = vmatprep.subr.mxu0 0.0
    %986 = vmatpush1.msra.mxu0 0.0
    %987 = vmatprep.subr.mxu0 0.0
    %988 = vmatpush1.msra.mxu0 0.0
    %989 = vmatprep.subr.mxu0 0.0
    %990 = vmatpush1.msra.mxu0 0.0
    %991 = vmatprep.subr.mxu0 0.0
    %992 = vmatpush1.msra.mxu0 0.0
    %993 = vmatprep.subr.mxu0 0.0
    %994 = vmatpush1.msra.mxu0 0.0
    %995 = vmatprep.subr.mxu0 0.0
    %996 = vmatpush1.msra.mxu0 0.0
    %997 = vmatprep.subr.mxu0 0.0
    %998 = vmatpush1.msra.mxu0 0.0
    %999 = vmatprep.subr.mxu0 0.0
    %1000 = vmatpush1.msra.mxu0 0.0
    %1001 = vmatprep.subr.mxu0 0.0
    %1002 = vmatpush1.msra.mxu0 0.0
    %1003 = vmatprep.subr.mxu0 0.0
    %1004 = vmatpush1.msra.mxu0 0.0
    %1005 = vmatprep.subr.mxu0 0.0
    %1006 = vmatpush1.msra.mxu0 0.0
    %1007 = vmatprep.subr.mxu0 0.0
    %1008 = vmatpush1.msra.mxu0 0.0
    %1009 = vmatprep.subr.mxu0 0.0
    %1010 = vmatpush1.msra.mxu0 0.0
    %1011 = vmatprep.subr.mxu0 0.0
    %1012 = vmatpush1.msra.mxu0 0.0
    %1013 = vmatprep.subr.mxu0 0.0
    %1014 = vmatpush1.msra.mxu0 0.0
    %1015 = vmatprep.subr.mxu0 0.0
    %1016 = vmatpush1.msra.mxu0 0.0
    %1017 = vmatprep.subr.mxu0 0.0
    %1018 = vmatpush1.msra.mxu0 0.0
    %1019 = vmatprep.subr.mxu0 0.0
    %1020 = vmatpush1.msra.mxu0 0.0
    %1021 = vmatprep.subr.mxu0 0.0
    %1022 = vmatpush1.msra.mxu0 0.0
    %1023 = vmatprep.subr.mxu0 0.0
    %1024 = vmatpush1.msra.mxu0 0.0
    %1025 = vmatprep.subr.mxu0 0.0
    %1026 = vmatpush1.msra.mxu0 0.0
    %1027 = vmatprep.subr.mxu0 0.0
    %1028 = vmatpush1.msra.mxu0 0.0
    %1029 = vmatprep.subr.mxu0 0.0
    %1030 = vmatpush1.msra.mxu0 0.0
    %1031 = vmatprep.subr.mxu0 0.0
    %1032 = vmatpush1.msra.mxu0 0.0
    %1033 = vmatprep.subr.mxu0 0.0
    %1034 = vmatpush1.msra.mxu0 0.0
    %1035 = vmatprep.subr.mxu0 0.0
    %1036 = vmatpush1.msra.mxu0 0.0
    %1037 = vmatprep.subr.mxu0 0.0
    %1038 = vmatpush1.msra.mxu0 0.0
    %1039 = vmatprep.subr.mxu0 0.0
    %1040 = vmatpush1.msra.mxu0 0.0
    %1041 = vmatprep.subr.mxu0 0.0
    %1042 = vmatpush1.msra.mxu0 0.0
    %1043 = vmatprep.subr.mxu0 0.0
    %1044 = vmatpush1.msra.mxu0 0.0
    %1045 = vmatprep.mubr.f32.mxu0 0.0
    %1046 = vmatmul.mubr.f32.gmra.mrb[0].mxu0 %v976
    %v1047 = vpop.f32.mrb[0].mxu0
    %v1048 = vadd.f32 0.0, %v1047
    %v1049 = vpop.f32.mrb[0].mxu0
    %1050 = vmatprep.mubr.f32.mxu0 0.0
    %1051 = vmatmul.mubr.f32.gmra.mrb[0].mxu0 %v979
    %v1052 = vpop.f32.mrb[0].mxu0
    %v1053 = vadd.f32 0.0, %v1052
    %v1054 = vpop.f32.mrb[0].mxu0
    %1055 = vdwg.mxu0
    %v1056 = vadd.f32 %v641, %v1048
    %v1057 = vadd.f32 %v642, %v1053
    %1058 = vrot.lane.b32.xlu0 %v211, 112
    %v1059 = vpop.permute.xlu0 %1058
    %1060 = vrot.lane.b32.xlu0 %v211, 80
    %v1061 = vpop.permute.xlu0 %1060
    %v1062 = vsel %vm233, %v1059, 0
    %v1064 = vsel %vm233, %v1061, 0
    %1066 = vmatprep.subr.mxu0 0.0
    %1067 = vmatpush1.xpose.msra.mxu0 %v1064
    %1068 = vmatprep.subr.mxu0 0.0
    %1069 = vmatpush1.xpose.msra.mxu0 0.0
    %1070 = vmatprep.subr.mxu0 0.0
    %1071 = vmatpush1.xpose.msra.mxu0 0.0
    %1072 = vmatprep.subr.mxu0 0.0
    %1073 = vmatpush1.xpose.msra.mxu0 0.0
    %1074 = vmatprep.subr.mxu0 0.0
    %1075 = vmatpush1.xpose.msra.mxu0 0.0
    %1076 = vmatprep.subr.mxu0 0.0
    %1077 = vmatpush1.xpose.msra.mxu0 0.0
    %1078 = vmatprep.subr.mxu0 0.0
    %1079 = vmatpush1.xpose.msra.mxu0 0.0
    %1080 = vmatprep.subr.mxu0 0.0
    %1081 = vmatpush1.xpose.msra.mxu0 0.0
    %1082 = vmatprep.subr.mxu0 0.0
    %1083 = vmatpush1.xpose.msra.mxu0 0.0
    %1084 = vmatprep.subr.mxu0 0.0
    %1085 = vmatpush1.xpose.msra.mxu0 0.0
    %1086 = vmatprep.subr.mxu0 0.0
    %1087 = vmatpush1.xpose.msra.mxu0 0.0
    %1088 = vmatprep.subr.mxu0 0.0
    %1089 = vmatpush1.xpose.msra.mxu0 0.0
    %1090 = vmatprep.subr.mxu0 0.0
    %1091 = vmatpush1.xpose.msra.mxu0 0.0
    %1092 = vmatprep.subr.mxu0 0.0
    %1093 = vmatpush1.xpose.msra.mxu0 0.0
    %1094 = vmatprep.subr.mxu0 0.0
    %1095 = vmatpush1.xpose.msra.mxu0 0.0
    %1096 = vmatprep.subr.mxu0 0.0
    %1097 = vmatpush1.xpose.msra.mxu0 0.0
    %1098 = vmatprep.subr.mxu0 0.0
    %1099 = vmatpush1.xpose.msra.mxu0 0.0
    %1100 = vmatprep.subr.mxu0 0.0
    %1101 = vmatpush1.xpose.msra.mxu0 0.0
    %1102 = vmatprep.subr.mxu0 0.0
    %1103 = vmatpush1.xpose.msra.mxu0 0.0
    %1104 = vmatprep.subr.mxu0 0.0
    %1105 = vmatpush1.xpose.msra.mxu0 0.0
    %1106 = vmatprep.subr.mxu0 0.0
    %1107 = vmatpush1.xpose.msra.mxu0 0.0
    %1108 = vmatprep.subr.mxu0 0.0
    %1109 = vmatpush1.xpose.msra.mxu0 0.0
    %1110 = vmatprep.subr.mxu0 0.0
    %1111 = vmatpush1.xpose.msra.mxu0 0.0
    %1112 = vmatprep.subr.mxu0 0.0
    %1113 = vmatpush1.xpose.msra.mxu0 0.0
    %1114 = vmatprep.subr.mxu0 0.0
    %1115 = vmatpush1.xpose.msra.mxu0 0.0
    %1116 = vmatprep.subr.mxu0 0.0
    %1117 = vmatpush1.xpose.msra.mxu0 0.0
    %1118 = vmatprep.subr.mxu0 0.0
    %1119 = vmatpush1.xpose.msra.mxu0 0.0
    %1120 = vmatprep.subr.mxu0 0.0
    %1121 = vmatpush1.xpose.msra.mxu0 0.0
    %1122 = vmatprep.subr.mxu0 0.0
    %1123 = vmatpush1.xpose.msra.mxu0 0.0
    %1124 = vmatprep.subr.mxu0 0.0
    %1125 = vmatpush1.xpose.msra.mxu0 0.0
    %1126 = vmatprep.subr.mxu0 0.0
    %1127 = vmatpush1.xpose.msra.mxu0 0.0
    %1128 = vmatprep.subr.mxu0 0.0
    %1129 = vmatpush1.xpose.msra.mxu0 0.0
    %1130 = vmatprep.mubr.f32.mxu0 0.0
    %1131 = vmatmul.mubr.f32.gmra.mrb[0].mxu0 %v1062
    %v1132 = vpop.f32.mrb[0].mxu0
    %v1133 = vadd.f32 %v222, %v1132
    %v1134 = vpop.f32.mrb[0].mxu0
    %1135 = vdwg.mxu0
    %1136 = vrot.lane.b32.xlu0 %v216, 112
    %v1137 = vpop.permute.xlu0 %1136
    %1138 = vrot.lane.b32.xlu0 %v216, 80
    %v1139 = vpop.permute.xlu0 %1138
    %v1140 = vsel %vm233, %v1137, 0
    %v1142 = vsel %vm233, %v1139, 0
    %1144 = vmatprep.subr.mxu0 0.0
    %1145 = vmatpush1.xpose.msra.mxu0 %v1142
    %1146 = vmatprep.subr.mxu0 0.0
    %1147 = vmatpush1.xpose.msra.mxu0 0.0
    %1148 = vmatprep.subr.mxu0 0.0
    %1149 = vmatpush1.xpose.msra.mxu0 0.0
    %1150 = vmatprep.subr.mxu0 0.0
    %1151 = vmatpush1.xpose.msra.mxu0 0.0
    %1152 = vmatprep.subr.mxu0 0.0
    %1153 = vmatpush1.xpose.msra.mxu0 0.0
    %1154 = vmatprep.subr.mxu0 0.0
    %1155 = vmatpush1.xpose.msra.mxu0 0.0
    %1156 = vmatprep.subr.mxu0 0.0
    %1157 = vmatpush1.xpose.msra.mxu0 0.0
    %1158 = vmatprep.subr.mxu0 0.0
    %1159 = vmatpush1.xpose.msra.mxu0 0.0
    %1160 = vmatprep.subr.mxu0 0.0
    %1161 = vmatpush1.xpose.msra.mxu0 0.0
    %1162 = vmatprep.subr.mxu0 0.0
    %1163 = vmatpush1.xpose.msra.mxu0 0.0
    %1164 = vmatprep.subr.mxu0 0.0
    %1165 = vmatpush1.xpose.msra.mxu0 0.0
    %1166 = vmatprep.subr.mxu0 0.0
    %1167 = vmatpush1.xpose.msra.mxu0 0.0
    %1168 = vmatprep.subr.mxu0 0.0
    %1169 = vmatpush1.xpose.msra.mxu0 0.0
    %1170 = vmatprep.subr.mxu0 0.0
    %1171 = vmatpush1.xpose.msra.mxu0 0.0
    %1172 = vmatprep.subr.mxu0 0.0
    %1173 = vmatpush1.xpose.msra.mxu0 0.0
    %1174 = vmatprep.subr.mxu0 0.0
    %1175 = vmatpush1.xpose.msra.mxu0 0.0
    %1176 = vmatprep.subr.mxu0 0.0
    %1177 = vmatpush1.xpose.msra.mxu0 0.0
    %1178 = vmatprep.subr.mxu0 0.0
    %1179 = vmatpush1.xpose.msra.mxu0 0.0
    %1180 = vmatprep.subr.mxu0 0.0
    %1181 = vmatpush1.xpose.msra.mxu0 0.0
    %1182 = vmatprep.subr.mxu0 0.0
    %1183 = vmatpush1.xpose.msra.mxu0 0.0
    %1184 = vmatprep.subr.mxu0 0.0
    %1185 = vmatpush1.xpose.msra.mxu0 0.0
    %1186 = vmatprep.subr.mxu0 0.0
    %1187 = vmatpush1.xpose.msra.mxu0 0.0
    %1188 = vmatprep.subr.mxu0 0.0
    %1189 = vmatpush1.xpose.msra.mxu0 0.0
    %1190 = vmatprep.subr.mxu0 0.0
    %1191 = vmatpush1.xpose.msra.mxu0 0.0
    %1192 = vmatprep.subr.mxu0 0.0
    %1193 = vmatpush1.xpose.msra.mxu0 0.0
    %1194 = vmatprep.subr.mxu0 0.0
    %1195 = vmatpush1.xpose.msra.mxu0 0.0
    %1196 = vmatprep.subr.mxu0 0.0
    %1197 = vmatpush1.xpose.msra.mxu0 0.0
    %1198 = vmatprep.subr.mxu0 0.0
    %1199 = vmatpush1.xpose.msra.mxu0 0.0
    %1200 = vmatprep.subr.mxu0 0.0
    %1201 = vmatpush1.xpose.msra.mxu0 0.0
    %1202 = vmatprep.subr.mxu0 0.0
    %1203 = vmatpush1.xpose.msra.mxu0 0.0
    %1204 = vmatprep.subr.mxu0 0.0
    %1205 = vmatpush1.xpose.msra.mxu0 0.0
    %1206 = vmatprep.subr.mxu0 0.0
    %1207 = vmatpush1.xpose.msra.mxu0 0.0
    %1208 = vmatprep.mubr.f32.mxu0 0.0
    %1209 = vmatmul.mubr.f32.gmra.mrb[0].mxu0 %v1140
    %v1210 = vpop.f32.mrb[0].mxu0
    %v1211 = vadd.f32 %v222, %v1210
    %v1212 = vpop.f32.mrb[0].mxu0
    %1213 = vdwg.mxu0
    %v1214 = vsel %vm233, %v1133, -inf
    %1215 = vmax.xlane.f32.xlu0 %v1214
    %v1216 = vpop.xlane.xlu0 %1215
    %v1217 = vsel %vm233, %v1211, -inf
    %1218 = vmax.xlane.f32.xlu0 %v1217
    %v1219 = vpop.xlane.xlu0 %1218
    %v1220 = vsub.f32 %v1133, %v1216
    %v1221 = vsub.f32 %v1211, %v1219
    %v1222 = vmul.f32 %v1220, 1.442695
    %v1223 = vpow.pop %v1222
    %v1224 = vmul.f32 %v1221, 1.442695
    %v1225 = vpow.pop %v1224
    %v1226 = vsel %vm233, %v1223, 0.0
    %1227 = vadd.xlane.f32.xlu0 %v1226
    %v1228 = vpop.xlane.xlu0 %1227
    %v1229 = vsel %vm233, %v1225, 0.0
    %1230 = vadd.xlane.f32.xlu0 %v1229
    %v1231 = vpop.xlane.xlu0 %1230
    %1232 = vrot.lane.b32.xlu0 %v211, 48
    %v1233 = vpop.permute.xlu0 %1232
    %v1236 = vsel %vm233, %v1223, 0
    %1238 = vmatprep.subr.mxu0 0.0
    %1239 = vmatpush1.msra.mxu0 %v1233
    %1240 = vmatprep.subr.mxu0 0.0
    %1241 = vmatpush1.msra.mxu0 0.0
    %1242 = vmatprep.subr.mxu0 0.0
    %1243 = vmatpush1.msra.mxu0 0.0
    %1244 = vmatprep.subr.mxu0 0.0
    %1245 = vmatpush1.msra.mxu0 0.0
    %1246 = vmatprep.subr.mxu0 0.0
    %1247 = vmatpush1.msra.mxu0 0.0
    %1248 = vmatprep.subr.mxu0 0.0
    %1249 = vmatpush1.msra.mxu0 0.0
    %1250 = vmatprep.subr.mxu0 0.0
    %1251 = vmatpush1.msra.mxu0 0.0
    %1252 = vmatprep.subr.mxu0 0.0
    %1253 = vmatpush1.msra.mxu0 0.0
    %1254 = vmatprep.subr.mxu0 0.0
    %1255 = vmatpush1.msra.mxu0 0.0
    %1256 = vmatprep.subr.mxu0 0.0
    %1257 = vmatpush1.msra.mxu0 0.0
    %1258 = vmatprep.subr.mxu0 0.0
    %1259 = vmatpush1.msra.mxu0 0.0
    %1260 = vmatprep.subr.mxu0 0.0
    %1261 = vmatpush1.msra.mxu0 0.0
    %1262 = vmatprep.subr.mxu0 0.0
    %1263 = vmatpush1.msra.mxu0 0.0
    %1264 = vmatprep.subr.mxu0 0.0
    %1265 = vmatpush1.msra.mxu0 0.0
    %1266 = vmatprep.subr.mxu0 0.0
    %1267 = vmatpush1.msra.mxu0 0.0
    %1268 = vmatprep.subr.mxu0 0.0
    %1269 = vmatpush1.msra.mxu0 0.0
    %1270 = vmatprep.subr.mxu0 0.0
    %1271 = vmatpush1.msra.mxu0 0.0
    %1272 = vmatprep.subr.mxu0 0.0
    %1273 = vmatpush1.msra.mxu0 0.0
    %1274 = vmatprep.subr.mxu0 0.0
    %1275 = vmatpush1.msra.mxu0 0.0
    %1276 = vmatprep.subr.mxu0 0.0
    %1277 = vmatpush1.msra.mxu0 0.0
    %1278 = vmatprep.subr.mxu0 0.0
    %1279 = vmatpush1.msra.mxu0 0.0
    %1280 = vmatprep.subr.mxu0 0.0
    %1281 = vmatpush1.msra.mxu0 0.0
    %1282 = vmatprep.subr.mxu0 0.0
    %1283 = vmatpush1.msra.mxu0 0.0
    %1284 = vmatprep.subr.mxu0 0.0
    %1285 = vmatpush1.msra.mxu0 0.0
    %1286 = vmatprep.subr.mxu0 0.0
    %1287 = vmatpush1.msra.mxu0 0.0
    %1288 = vmatprep.subr.mxu0 0.0
    %1289 = vmatpush1.msra.mxu0 0.0
    %1290 = vmatprep.subr.mxu0 0.0
    %1291 = vmatpush1.msra.mxu0 0.0
    %1292 = vmatprep.subr.mxu0 0.0
    %1293 = vmatpush1.msra.mxu0 0.0
    %1294 = vmatprep.subr.mxu0 0.0
    %1295 = vmatpush1.msra.mxu0 0.0
    %1296 = vmatprep.subr.mxu0 0.0
    %1297 = vmatpush1.msra.mxu0 0.0
    %1298 = vmatprep.subr.mxu0 0.0
    %1299 = vmatpush1.msra.mxu0 0.0
    %1300 = vmatprep.subr.mxu0 0.0
    %1301 = vmatpush1.msra.mxu0 0.0
    %1302 = vmatprep.mubr.f32.mxu0 0.0
    %1303 = vmatmul.mubr.f32.gmra.mrb[0].mxu0 %v1236
    %v1304 = vpop.f32.mrb[0].mxu0
    %v1305 = vadd.f32 0.0, %v1304
    %v1306 = vpop.f32.mrb[0].mxu0
    %1307 = vdwg.mxu0
    %1308 = vrot.lane.b32.xlu0 %v216, 48
    %v1309 = vpop.permute.xlu0 %1308
    %v1312 = vsel %vm233, %v1225, 0
    %1314 = vmatprep.subr.mxu0 0.0
    %1315 = vmatpush1.msra.mxu0 %v1309
    %1316 = vmatprep.subr.mxu0 0.0
    %1317 = vmatpush1.msra.mxu0 0.0
    %1318 = vmatprep.subr.mxu0 0.0
    %1319 = vmatpush1.msra.mxu0 0.0
    %1320 = vmatprep.subr.mxu0 0.0
    %1321 = vmatpush1.msra.mxu0 0.0
    %1322 = vmatprep.subr.mxu0 0.0
    %1323 = vmatpush1.msra.mxu0 0.0
    %1324 = vmatprep.subr.mxu0 0.0
    %1325 = vmatpush1.msra.mxu0 0.0
    %1326 = vmatprep.subr.mxu0 0.0
    %1327 = vmatpush1.msra.mxu0 0.0
    %1328 = vmatprep.subr.mxu0 0.0
    %1329 = vmatpush1.msra.mxu0 0.0
    %1330 = vmatprep.subr.mxu0 0.0
    %1331 = vmatpush1.msra.mxu0 0.0
    %1332 = vmatprep.subr.mxu0 0.0
    %1333 = vmatpush1.msra.mxu0 0.0
    %1334 = vmatprep.subr.mxu0 0.0
    %1335 = vmatpush1.msra.mxu0 0.0
    %1336 = vmatprep.subr.mxu0 0.0
    %1337 = vmatpush1.msra.mxu0 0.0
    %1338 = vmatprep.subr.mxu0 0.0
    %1339 = vmatpush1.msra.mxu0 0.0
    %1340 = vmatprep.subr.mxu0 0.0
    %1341 = vmatpush1.msra.mxu0 0.0
    %1342 = vmatprep.subr.mxu0 0.0
    %1343 = vmatpush1.msra.mxu0 0.0
    %1344 = vmatprep.subr.mxu0 0.0
    %1345 = vmatpush1.msra.mxu0 0.0
    %1346 = vmatprep.subr.mxu0 0.0
    %1347 = vmatpush1.msra.mxu0 0.0
    %1348 = vmatprep.subr.mxu0 0.0
    %1349 = vmatpush1.msra.mxu0 0.0
    %1350 = vmatprep.subr.mxu0 0.0
    %1351 = vmatpush1.msra.mxu0 0.0
    %1352 = vmatprep.subr.mxu0 0.0
    %1353 = vmatpush1.msra.mxu0 0.0
    %1354 = vmatprep.subr.mxu0 0.0
    %1355 = vmatpush1.msra.mxu0 0.0
    %1356 = vmatprep.subr.mxu0 0.0
    %1357 = vmatpush1.msra.mxu0 0.0
    %1358 = vmatprep.subr.mxu0 0.0
    %1359 = vmatpush1.msra.mxu0 0.0
    %1360 = vmatprep.subr.mxu0 0.0
    %1361 = vmatpush1.msra.mxu0 0.0
    %1362 = vmatprep.subr.mxu0 0.0
    %1363 = vmatpush1.msra.mxu0 0.0
    %1364 = vmatprep.subr.mxu0 0.0
    %1365 = vmatpush1.msra.mxu0 0.0
    %1366 = vmatprep.subr.mxu0 0.0
    %1367 = vmatpush1.msra.mxu0 0.0
    %1368 = vmatprep.subr.mxu0 0.0
    %1369 = vmatpush1.msra.mxu0 0.0
    %1370 = vmatprep.subr.mxu0 0.0
    %1371 = vmatpush1.msra.mxu0 0.0
    %1372 = vmatprep.subr.mxu0 0.0
    %1373 = vmatpush1.msra.mxu0 0.0
    %1374 = vmatprep.subr.mxu0 0.0
    %1375 = vmatpush1.msra.mxu0 0.0
    %1376 = vmatprep.subr.mxu0 0.0
    %1377 = vmatpush1.msra.mxu0 0.0
    %1378 = vmatprep.mubr.f32.mxu0 0.0
    %1379 = vmatmul.mubr.f32.gmra.mrb[0].mxu0 %v1312
    %v1380 = vpop.f32.mrb[0].mxu0
    %v1381 = vadd.f32 0.0, %v1380
    %v1382 = vpop.f32.mrb[0].mxu0
    %1383 = vdwg.mxu0
    %v1384 = vrcp.pop %v1228
    %v1385 = vrcp.pop %v1231
    %v1386 = vmul.f32 %v1305, %v1384
    %v1387 = vmul.f32 %v1381, %v1385
    %s1388 = scalar_lea.vmem %s4, 16
    %v1389 = vld [vmem:[%s1388] sm:$0xff]
    %v1391 = vsel %vm233, %v1386, 0
    %v1394 = vsel %vm233, %v1387, 0
    %1396 = vmatprep.subr.mxu0 0.0
    %1397 = vmatpush1.msra.mxu0 %v1389
    %1398 = vmatprep.subr.mxu0 0.0
    %1399 = vmatpush1.msra.mxu0 0.0
    %1400 = vmatprep.subr.mxu0 0.0
    %1401 = vmatpush1.msra.mxu0 0.0
    %1402 = vmatprep.subr.mxu0 0.0
    %1403 = vmatpush1.msra.mxu0 0.0
    %1404 = vmatprep.subr.mxu0 0.0
    %1405 = vmatpush1.msra.mxu0 0.0
    %1406 = vmatprep.subr.mxu0 0.0
    %1407 = vmatpush1.msra.mxu0 0.0
    %1408 = vmatprep.subr.mxu0 0.0
    %1409 = vmatpush1.msra.mxu0 0.0
    %1410 = vmatprep.subr.mxu0 0.0
    %1411 = vmatpush1.msra.mxu0 0.0
    %1412 = vmatprep.subr.mxu0 0.0
    %1413 = vmatpush1.msra.mxu0 0.0
    %1414 = vmatprep.subr.mxu0 0.0
    %1415 = vmatpush1.msra.mxu0 0.0
    %1416 = vmatprep.subr.mxu0 0.0
    %1417 = vmatpush1.msra.mxu0 0.0
    %1418 = vmatprep.subr.mxu0 0.0
    %1419 = vmatpush1.msra.mxu0 0.0
    %1420 = vmatprep.subr.mxu0 0.0
    %1421 = vmatpush1.msra.mxu0 0.0
    %1422 = vmatprep.subr.mxu0 0.0
    %1423 = vmatpush1.msra.mxu0 0.0
    %1424 = vmatprep.subr.mxu0 0.0
    %1425 = vmatpush1.msra.mxu0 0.0
    %1426 = vmatprep.subr.mxu0 0.0
    %1427 = vmatpush1.msra.mxu0 0.0
    %1428 = vmatprep.subr.mxu0 0.0
    %1429 = vmatpush1.msra.mxu0 0.0
    %1430 = vmatprep.subr.mxu0 0.0
    %1431 = vmatpush1.msra.mxu0 0.0
    %1432 = vmatprep.subr.mxu0 0.0
    %1433 = vmatpush1.msra.mxu0 0.0
    %1434 = vmatprep.subr.mxu0 0.0
    %1435 = vmatpush1.msra.mxu0 0.0
    %1436 = vmatprep.subr.mxu0 0.0
    %1437 = vmatpush1.msra.mxu0 0.0
    %1438 = vmatprep.subr.mxu0 0.0
    %1439 = vmatpush1.msra.mxu0 0.0
    %1440 = vmatprep.subr.mxu0 0.0
    %1441 = vmatpush1.msra.mxu0 0.0
    %1442 = vmatprep.subr.mxu0 0.0
    %1443 = vmatpush1.msra.mxu0 0.0
    %1444 = vmatprep.subr.mxu0 0.0
    %1445 = vmatpush1.msra.mxu0 0.0
    %1446 = vmatprep.subr.mxu0 0.0
    %1447 = vmatpush1.msra.mxu0 0.0
    %1448 = vmatprep.subr.mxu0 0.0
    %1449 = vmatpush1.msra.mxu0 0.0
    %1450 = vmatprep.subr.mxu0 0.0
    %1451 = vmatpush1.msra.mxu0 0.0
    %1452 = vmatprep.subr.mxu0 0.0
    %1453 = vmatpush1.msra.mxu0 0.0
    %1454 = vmatprep.subr.mxu0 0.0
    %1455 = vmatpush1.msra.mxu0 0.0
    %1456 = vmatprep.subr.mxu0 0.0
    %1457 = vmatpush1.msra.mxu0 0.0
    %1458 = vmatprep.subr.mxu0 0.0
    %1459 = vmatpush1.msra.mxu0 0.0
    %1460 = vmatprep.mubr.f32.mxu0 0.0
    %1461 = vmatmul.mubr.f32.gmra.mrb[0].mxu0 %v1391
    %v1462 = vpop.f32.mrb[0].mxu0
    %v1463 = vadd.f32 0.0, %v1462
    %v1464 = vpop.f32.mrb[0].mxu0
    %1465 = vmatprep.mubr.f32.mxu0 0.0
    %1466 = vmatmul.mubr.f32.gmra.mrb[0].mxu0 %v1394
    %v1467 = vpop.f32.mrb[0].mxu0
    %v1468 = vadd.f32 0.0, %v1467
    %v1469 = vpop.f32.mrb[0].mxu0
    %1470 = vdwg.mxu0
    %v1471 = vadd.f32 %v1056, %v1463
    %v1472 = vadd.f32 %v1057, %v1468
    %1473 = vrot.lane.b32.xlu0 %v211, 104
    %v1474 = vpop.permute.xlu0 %1473
    %1475 = vrot.lane.b32.xlu0 %v211, 72
    %v1476 = vpop.permute.xlu0 %1475
    %v1477 = vsel %vm233, %v1474, 0
    %v1479 = vsel %vm233, %v1476, 0
    %1481 = vmatprep.subr.mxu0 0.0
    %1482 = vmatpush1.xpose.msra.mxu0 %v1479
    %1483 = vmatprep.subr.mxu0 0.0
    %1484 = vmatpush1.xpose.msra.mxu0 0.0
    %1485 = vmatprep.subr.mxu0 0.0
    %1486 = vmatpush1.xpose.msra.mxu0 0.0
    %1487 = vmatprep.subr.mxu0 0.0
    %1488 = vmatpush1.xpose.msra.mxu0 0.0
    %1489 = vmatprep.subr.mxu0 0.0
    %1490 = vmatpush1.xpose.msra.mxu0 0.0
    %1491 = vmatprep.subr.mxu0 0.0
    %1492 = vmatpush1.xpose.msra.mxu0 0.0
    %1493 = vmatprep.subr.mxu0 0.0
    %1494 = vmatpush1.xpose.msra.mxu0 0.0
    %1495 = vmatprep.subr.mxu0 0.0
    %1496 = vmatpush1.xpose.msra.mxu0 0.0
    %1497 = vmatprep.subr.mxu0 0.0
    %1498 = vmatpush1.xpose.msra.mxu0 0.0
    %1499 = vmatprep.subr.mxu0 0.0
    %1500 = vmatpush1.xpose.msra.mxu0 0.0
    %1501 = vmatprep.subr.mxu0 0.0
    %1502 = vmatpush1.xpose.msra.mxu0 0.0
    %1503 = vmatprep.subr.mxu0 0.0
    %1504 = vmatpush1.xpose.msra.mxu0 0.0
    %1505 = vmatprep.subr.mxu0 0.0
    %1506 = vmatpush1.xpose.msra.mxu0 0.0
    %1507 = vmatprep.subr.mxu0 0.0
    %1508 = vmatpush1.xpose.msra.mxu0 0.0
    %1509 = vmatprep.subr.mxu0 0.0
    %1510 = vmatpush1.xpose.msra.mxu0 0.0
    %1511 = vmatprep.subr.mxu0 0.0
    %1512 = vmatpush1.xpose.msra.mxu0 0.0
    %1513 = vmatprep.subr.mxu0 0.0
    %1514 = vmatpush1.xpose.msra.mxu0 0.0
    %1515 = vmatprep.subr.mxu0 0.0
    %1516 = vmatpush1.xpose.msra.mxu0 0.0
    %1517 = vmatprep.subr.mxu0 0.0
    %1518 = vmatpush1.xpose.msra.mxu0 0.0
    %1519 = vmatprep.subr.mxu0 0.0
    %1520 = vmatpush1.xpose.msra.mxu0 0.0
    %1521 = vmatprep.subr.mxu0 0.0
    %1522 = vmatpush1.xpose.msra.mxu0 0.0
    %1523 = vmatprep.subr.mxu0 0.0
    %1524 = vmatpush1.xpose.msra.mxu0 0.0
    %1525 = vmatprep.subr.mxu0 0.0
    %1526 = vmatpush1.xpose.msra.mxu0 0.0
    %1527 = vmatprep.subr.mxu0 0.0
    %1528 = vmatpush1.xpose.msra.mxu0 0.0
    %1529 = vmatprep.subr.mxu0 0.0
    %1530 = vmatpush1.xpose.msra.mxu0 0.0
    %1531 = vmatprep.subr.mxu0 0.0
    %1532 = vmatpush1.xpose.msra.mxu0 0.0
    %1533 = vmatprep.subr.mxu0 0.0
    %1534 = vmatpush1.xpose.msra.mxu0 0.0
    %1535 = vmatprep.subr.mxu0 0.0
    %1536 = vmatpush1.xpose.msra.mxu0 0.0
    %1537 = vmatprep.subr.mxu0 0.0
    %1538 = vmatpush1.xpose.msra.mxu0 0.0
    %1539 = vmatprep.subr.mxu0 0.0
    %1540 = vmatpush1.xpose.msra.mxu0 0.0
    %1541 = vmatprep.subr.mxu0 0.0
    %1542 = vmatpush1.xpose.msra.mxu0 0.0
    %1543 = vmatprep.subr.mxu0 0.0
    %1544 = vmatpush1.xpose.msra.mxu0 0.0
    %1545 = vmatprep.mubr.f32.mxu0 0.0
    %1546 = vmatmul.mubr.f32.gmra.mrb[0].mxu0 %v1477
    %v1547 = vpop.f32.mrb[0].mxu0
    %v1548 = vadd.f32 %v222, %v1547
    %v1549 = vpop.f32.mrb[0].mxu0
    %1550 = vdwg.mxu0
    %1551 = vrot.lane.b32.xlu0 %v216, 104
    %v1552 = vpop.permute.xlu0 %1551
    %1553 = vrot.lane.b32.xlu0 %v216, 72
    %v1554 = vpop.permute.xlu0 %1553
    %v1555 = vsel %vm233, %v1552, 0
    %v1557 = vsel %vm233, %v1554, 0
    %1559 = vmatprep.subr.mxu0 0.0
    %1560 = vmatpush1.xpose.msra.mxu0 %v1557
    %1561 = vmatprep.subr.mxu0 0.0
    %1562 = vmatpush1.xpose.msra.mxu0 0.0
    %1563 = vmatprep.subr.mxu0 0.0
    %1564 = vmatpush1.xpose.msra.mxu0 0.0
    %1565 = vmatprep.subr.mxu0 0.0
    %1566 = vmatpush1.xpose.msra.mxu0 0.0
    %1567 = vmatprep.subr.mxu0 0.0
    %1568 = vmatpush1.xpose.msra.mxu0 0.0
    %1569 = vmatprep.subr.mxu0 0.0
    %1570 = vmatpush1.xpose.msra.mxu0 0.0
    %1571 = vmatprep.subr.mxu0 0.0
    %1572 = vmatpush1.xpose.msra.mxu0 0.0
    %1573 = vmatprep.subr.mxu0 0.0
    %1574 = vmatpush1.xpose.msra.mxu0 0.0
    %1575 = vmatprep.subr.mxu0 0.0
    %1576 = vmatpush1.xpose.msra.mxu0 0.0
    %1577 = vmatprep.subr.mxu0 0.0
    %1578 = vmatpush1.xpose.msra.mxu0 0.0
    %1579 = vmatprep.subr.mxu0 0.0
    %1580 = vmatpush1.xpose.msra.mxu0 0.0
    %1581 = vmatprep.subr.mxu0 0.0
    %1582 = vmatpush1.xpose.msra.mxu0 0.0
    %1583 = vmatprep.subr.mxu0 0.0
    %1584 = vmatpush1.xpose.msra.mxu0 0.0
    %1585 = vmatprep.subr.mxu0 0.0
    %1586 = vmatpush1.xpose.msra.mxu0 0.0
    %1587 = vmatprep.subr.mxu0 0.0
    %1588 = vmatpush1.xpose.msra.mxu0 0.0
    %1589 = vmatprep.subr.mxu0 0.0
    %1590 = vmatpush1.xpose.msra.mxu0 0.0
    %1591 = vmatprep.subr.mxu0 0.0
    %1592 = vmatpush1.xpose.msra.mxu0 0.0
    %1593 = vmatprep.subr.mxu0 0.0
    %1594 = vmatpush1.xpose.msra.mxu0 0.0
    %1595 = vmatprep.subr.mxu0 0.0
    %1596 = vmatpush1.xpose.msra.mxu0 0.0
    %1597 = vmatprep.subr.mxu0 0.0
    %1598 = vmatpush1.xpose.msra.mxu0 0.0
    %1599 = vmatprep.subr.mxu0 0.0
    %1600 = vmatpush1.xpose.msra.mxu0 0.0
    %1601 = vmatprep.subr.mxu0 0.0
    %1602 = vmatpush1.xpose.msra.mxu0 0.0
    %1603 = vmatprep.subr.mxu0 0.0
    %1604 = vmatpush1.xpose.msra.mxu0 0.0
    %1605 = vmatprep.subr.mxu0 0.0
    %1606 = vmatpush1.xpose.msra.mxu0 0.0
    %1607 = vmatprep.subr.mxu0 0.0
    %1608 = vmatpush1.xpose.msra.mxu0 0.0
    %1609 = vmatprep.subr.mxu0 0.0
    %1610 = vmatpush1.xpose.msra.mxu0 0.0
    %1611 = vmatprep.subr.mxu0 0.0
    %1612 = vmatpush1.xpose.msra.mxu0 0.0
    %1613 = vmatprep.subr.mxu0 0.0
    %1614 = vmatpush1.xpose.msra.mxu0 0.0
    %1615 = vmatprep.subr.mxu0 0.0
    %1616 = vmatpush1.xpose.msra.mxu0 0.0
    %1617 = vmatprep.subr.mxu0 0.0
    %1618 = vmatpush1.xpose.msra.mxu0 0.0
    %1619 = vmatprep.subr.mxu0 0.0
    %1620 = vmatpush1.xpose.msra.mxu0 0.0
    %1621 = vmatprep.subr.mxu0 0.0
    %1622 = vmatpush1.xpose.msra.mxu0 0.0
    %1623 = vmatprep.mubr.f32.mxu0 0.0
    %1624 = vmatmul.mubr.f32.gmra.mrb[0].mxu0 %v1555
    %v1625 = vpop.f32.mrb[0].mxu0
    %v1626 = vadd.f32 %v222, %v1625
    %v1627 = vpop.f32.mrb[0].mxu0
    %1628 = vdwg.mxu0
    %v1629 = vsel %vm233, %v1548, -inf
    %1630 = vmax.xlane.f32.xlu0 %v1629
    %v1631 = vpop.xlane.xlu0 %1630
    %v1632 = vsel %vm233, %v1626, -inf
    %1633 = vmax.xlane.f32.xlu0 %v1632
    %v1634 = vpop.xlane.xlu0 %1633
    %v1635 = vsub.f32 %v1548, %v1631
    %v1636 = vsub.f32 %v1626, %v1634
    %v1637 = vmul.f32 %v1635, 1.442695
    %v1638 = vpow.pop %v1637
    %v1639 = vmul.f32 %v1636, 1.442695
    %v1640 = vpow.pop %v1639
    %v1641 = vsel %vm233, %v1638, 0.0
    %1642 = vadd.xlane.f32.xlu0 %v1641
    %v1643 = vpop.xlane.xlu0 %1642
    %v1644 = vsel %vm233, %v1640, 0.0
    %1645 = vadd.xlane.f32.xlu0 %v1644
    %v1646 = vpop.xlane.xlu0 %1645
    %1647 = vrot.lane.b32.xlu0 %v211, 40
    %v1648 = vpop.permute.xlu0 %1647
    %v1651 = vsel %vm233, %v1638, 0
    %1653 = vmatprep.subr.mxu0 0.0
    %1654 = vmatpush1.msra.mxu0 %v1648
    %1655 = vmatprep.subr.mxu0 0.0
    %1656 = vmatpush1.msra.mxu0 0.0
    %1657 = vmatprep.subr.mxu0 0.0
    %1658 = vmatpush1.msra.mxu0 0.0
    %1659 = vmatprep.subr.mxu0 0.0
    %1660 = vmatpush1.msra.mxu0 0.0
    %1661 = vmatprep.subr.mxu0 0.0
    %1662 = vmatpush1.msra.mxu0 0.0
    %1663 = vmatprep.subr.mxu0 0.0
    %1664 = vmatpush1.msra.mxu0 0.0
    %1665 = vmatprep.subr.mxu0 0.0
    %1666 = vmatpush1.msra.mxu0 0.0
    %1667 = vmatprep.subr.mxu0 0.0
    %1668 = vmatpush1.msra.mxu0 0.0
    %1669 = vmatprep.subr.mxu0 0.0
    %1670 = vmatpush1.msra.mxu0 0.0
    %1671 = vmatprep.subr.mxu0 0.0
    %1672 = vmatpush1.msra.mxu0 0.0
    %1673 = vmatprep.subr.mxu0 0.0
    %1674 = vmatpush1.msra.mxu0 0.0
    %1675 = vmatprep.subr.mxu0 0.0
    %1676 = vmatpush1.msra.mxu0 0.0
    %1677 = vmatprep.subr.mxu0 0.0
    %1678 = vmatpush1.msra.mxu0 0.0
    %1679 = vmatprep.subr.mxu0 0.0
    %1680 = vmatpush1.msra.mxu0 0.0
    %1681 = vmatprep.subr.mxu0 0.0
    %1682 = vmatpush1.msra.mxu0 0.0
    %1683 = vmatprep.subr.mxu0 0.0
    %1684 = vmatpush1.msra.mxu0 0.0
    %1685 = vmatprep.subr.mxu0 0.0
    %1686 = vmatpush1.msra.mxu0 0.0
    %1687 = vmatprep.subr.mxu0 0.0
    %1688 = vmatpush1.msra.mxu0 0.0
    %1689 = vmatprep.subr.mxu0 0.0
    %1690 = vmatpush1.msra.mxu0 0.0
    %1691 = vmatprep.subr.mxu0 0.0
    %1692 = vmatpush1.msra.mxu0 0.0
    %1693 = vmatprep.subr.mxu0 0.0
    %1694 = vmatpush1.msra.mxu0 0.0
    %1695 = vmatprep.subr.mxu0 0.0
    %1696 = vmatpush1.msra.mxu0 0.0
    %1697 = vmatprep.subr.mxu0 0.0
    %1698 = vmatpush1.msra.mxu0 0.0
    %1699 = vmatprep.subr.mxu0 0.0
    %1700 = vmatpush1.msra.mxu0 0.0
    %1701 = vmatprep.subr.mxu0 0.0
    %1702 = vmatpush1.msra.mxu0 0.0
    %1703 = vmatprep.subr.mxu0 0.0
    %1704 = vmatpush1.msra.mxu0 0.0
    %1705 = vmatprep.subr.mxu0 0.0
    %1706 = vmatpush1.msra.mxu0 0.0
    %1707 = vmatprep.subr.mxu0 0.0
    %1708 = vmatpush1.msra.mxu0 0.0
    %1709 = vmatprep.subr.mxu0 0.0
    %1710 = vmatpush1.msra.mxu0 0.0
    %1711 = vmatprep.subr.mxu0 0.0
    %1712 = vmatpush1.msra.mxu0 0.0
    %1713 = vmatprep.subr.mxu0 0.0
    %1714 = vmatpush1.msra.mxu0 0.0
    %1715 = vmatprep.subr.mxu0 0.0
    %1716 = vmatpush1.msra.mxu0 0.0
    %1717 = vmatprep.mubr.f32.mxu0 0.0
    %1718 = vmatmul.mubr.f32.gmra.mrb[0].mxu0 %v1651
    %v1719 = vpop.f32.mrb[0].mxu0
    %v1720 = vadd.f32 0.0, %v1719
    %v1721 = vpop.f32.mrb[0].mxu0
    %1722 = vdwg.mxu0
    %1723 = vrot.lane.b32.xlu0 %v216, 40
    %v1724 = vpop.permute.xlu0 %1723
    %v1727 = vsel %vm233, %v1640, 0
    %1729 = vmatprep.subr.mxu0 0.0
    %1730 = vmatpush1.msra.mxu0 %v1724
    %1731 = vmatprep.subr.mxu0 0.0
    %1732 = vmatpush1.msra.mxu0 0.0
    %1733 = vmatprep.subr.mxu0 0.0
    %1734 = vmatpush1.msra.mxu0 0.0
    %1735 = vmatprep.subr.mxu0 0.0
    %1736 = vmatpush1.msra.mxu0 0.0
    %1737 = vmatprep.subr.mxu0 0.0
    %1738 = vmatpush1.msra.mxu0 0.0
    %1739 = vmatprep.subr.mxu0 0.0
    %1740 = vmatpush1.msra.mxu0 0.0
    %1741 = vmatprep.subr.mxu0 0.0
    %1742 = vmatpush1.msra.mxu0 0.0
    %1743 = vmatprep.subr.mxu0 0.0
    %1744 = vmatpush1.msra.mxu0 0.0
    %1745 = vmatprep.subr.mxu0 0.0
    %1746 = vmatpush1.msra.mxu0 0.0
    %1747 = vmatprep.subr.mxu0 0.0
    %1748 = vmatpush1.msra.mxu0 0.0
    %1749 = vmatprep.subr.mxu0 0.0
    %1750 = vmatpush1.msra.mxu0 0.0
    %1751 = vmatprep.subr.mxu0 0.0
    %1752 = vmatpush1.msra.mxu0 0.0
    %1753 = vmatprep.subr.mxu0 0.0
    %1754 = vmatpush1.msra.mxu0 0.0
    %1755 = vmatprep.subr.mxu0 0.0
    %1756 = vmatpush1.msra.mxu0 0.0
    %1757 = vmatprep.subr.mxu0 0.0
    %1758 = vmatpush1.msra.mxu0 0.0
    %1759 = vmatprep.subr.mxu0 0.0
    %1760 = vmatpush1.msra.mxu0 0.0
    %1761 = vmatprep.subr.mxu0 0.0
    %1762 = vmatpush1.msra.mxu0 0.0
    %1763 = vmatprep.subr.mxu0 0.0
    %1764 = vmatpush1.msra.mxu0 0.0
    %1765 = vmatprep.subr.mxu0 0.0
    %1766 = vmatpush1.msra.mxu0 0.0
    %1767 = vmatprep.subr.mxu0 0.0
    %1768 = vmatpush1.msra.mxu0 0.0
    %1769 = vmatprep.subr.mxu0 0.0
    %1770 = vmatpush1.msra.mxu0 0.0
    %1771 = vmatprep.subr.mxu0 0.0
    %1772 = vmatpush1.msra.mxu0 0.0
    %1773 = vmatprep.subr.mxu0 0.0
    %1774 = vmatpush1.msra.mxu0 0.0
    %1775 = vmatprep.subr.mxu0 0.0
    %1776 = vmatpush1.msra.mxu0 0.0
    %1777 = vmatprep.subr.mxu0 0.0
    %1778 = vmatpush1.msra.mxu0 0.0
    %1779 = vmatprep.subr.mxu0 0.0
    %1780 = vmatpush1.msra.mxu0 0.0
    %1781 = vmatprep.subr.mxu0 0.0
    %1782 = vmatpush1.msra.mxu0 0.0
    %1783 = vmatprep.subr.mxu0 0.0
    %1784 = vmatpush1.msra.mxu0 0.0
    %1785 = vmatprep.subr.mxu0 0.0
    %1786 = vmatpush1.msra.mxu0 0.0
    %1787 = vmatprep.subr.mxu0 0.0
    %1788 = vmatpush1.msra.mxu0 0.0
    %1789 = vmatprep.subr.mxu0 0.0
    %1790 = vmatpush1.msra.mxu0 0.0
    %1791 = vmatprep.subr.mxu0 0.0
    %1792 = vmatpush1.msra.mxu0 0.0
    %1793 = vmatprep.mubr.f32.mxu0 0.0
    %1794 = vmatmul.mubr.f32.gmra.mrb[0].mxu0 %v1727
    %v1795 = vpop.f32.mrb[0].mxu0
    %v1796 = vadd.f32 0.0, %v1795
    %v1797 = vpop.f32.mrb[0].mxu0
    %1798 = vdwg.mxu0
    %v1799 = vrcp.pop %v1643
    %v1800 = vrcp.pop %v1646
    %v1801 = vmul.f32 %v1720, %v1799
    %v1802 = vmul.f32 %v1796, %v1800
    %s1803 = scalar_lea.vmem %s4, 24
    %v1804 = vld [vmem:[%s1803] sm:$0xff]
    %v1806 = vsel %vm233, %v1801, 0
    %v1809 = vsel %vm233, %v1802, 0
    %1811 = vmatprep.subr.mxu0 0.0
    %1812 = vmatpush1.msra.mxu0 %v1804
    %1813 = vmatprep.subr.mxu0 0.0
    %1814 = vmatpush1.msra.mxu0 0.0
    %1815 = vmatprep.subr.mxu0 0.0
    %1816 = vmatpush1.msra.mxu0 0.0
    %1817 = vmatprep.subr.mxu0 0.0
    %1818 = vmatpush1.msra.mxu0 0.0
    %1819 = vmatprep.subr.mxu0 0.0
    %1820 = vmatpush1.msra.mxu0 0.0
    %1821 = vmatprep.subr.mxu0 0.0
    %1822 = vmatpush1.msra.mxu0 0.0
    %1823 = vmatprep.subr.mxu0 0.0
    %1824 = vmatpush1.msra.mxu0 0.0
    %1825 = vmatprep.subr.mxu0 0.0
    %1826 = vmatpush1.msra.mxu0 0.0
    %1827 = vmatprep.subr.mxu0 0.0
    %1828 = vmatpush1.msra.mxu0 0.0
    %1829 = vmatprep.subr.mxu0 0.0
    %1830 = vmatpush1.msra.mxu0 0.0
    %1831 = vmatprep.subr.mxu0 0.0
    %1832 = vmatpush1.msra.mxu0 0.0
    %1833 = vmatprep.subr.mxu0 0.0
    %1834 = vmatpush1.msra.mxu0 0.0
    %1835 = vmatprep.subr.mxu0 0.0
    %1836 = vmatpush1.msra.mxu0 0.0
    %1837 = vmatprep.subr.mxu0 0.0
    %1838 = vmatpush1.msra.mxu0 0.0
    %1839 = vmatprep.subr.mxu0 0.0
    %1840 = vmatpush1.msra.mxu0 0.0
    %1841 = vmatprep.subr.mxu0 0.0
    %1842 = vmatpush1.msra.mxu0 0.0
    %1843 = vmatprep.subr.mxu0 0.0
    %1844 = vmatpush1.msra.mxu0 0.0
    %1845 = vmatprep.subr.mxu0 0.0
    %1846 = vmatpush1.msra.mxu0 0.0
    %1847 = vmatprep.subr.mxu0 0.0
    %1848 = vmatpush1.msra.mxu0 0.0
    %1849 = vmatprep.subr.mxu0 0.0
    %1850 = vmatpush1.msra.mxu0 0.0
    %1851 = vmatprep.subr.mxu0 0.0
    %1852 = vmatpush1.msra.mxu0 0.0
    %1853 = vmatprep.subr.mxu0 0.0
    %1854 = vmatpush1.msra.mxu0 0.0
    %1855 = vmatprep.subr.mxu0 0.0
    %1856 = vmatpush1.msra.mxu0 0.0
    %1857 = vmatprep.subr.mxu0 0.0
    %1858 = vmatpush1.msra.mxu0 0.0
    %1859 = vmatprep.subr.mxu0 0.0
    %1860 = vmatpush1.msra.mxu0 0.0
    %1861 = vmatprep.subr.mxu0 0.0
    %1862 = vmatpush1.msra.mxu0 0.0
    %1863 = vmatprep.subr.mxu0 0.0
    %1864 = vmatpush1.msra.mxu0 0.0
    %1865 = vmatprep.subr.mxu0 0.0
    %1866 = vmatpush1.msra.mxu0 0.0
    %1867 = vmatprep.subr.mxu0 0.0
    %1868 = vmatpush1.msra.mxu0 0.0
    %1869 = vmatprep.subr.mxu0 0.0
    %1870 = vmatpush1.msra.mxu0 0.0
    %1871 = vmatprep.subr.mxu0 0.0
    %1872 = vmatpush1.msra.mxu0 0.0
    %1873 = vmatprep.subr.mxu0 0.0
    %1874 = vmatpush1.msra.mxu0 0.0
    %1875 = vmatprep.mubr.f32.mxu0 0.0
    %1876 = vmatmul.mubr.f32.gmra.mrb[0].mxu0 %v1806
    %v1877 = vpop.f32.mrb[0].mxu0
    %v1878 = vadd.f32 0.0, %v1877
    %v1879 = vpop.f32.mrb[0].mxu0
    %1880 = vmatprep.mubr.f32.mxu0 0.0
    %1881 = vmatmul.mubr.f32.gmra.mrb[0].mxu0 %v1809
    %v1882 = vpop.f32.mrb[0].mxu0
    %v1883 = vadd.f32 0.0, %v1882
    %v1884 = vpop.f32.mrb[0].mxu0
    %1885 = vdwg.mxu0
    %v1886 = vadd.f32 %v1471, %v1878
    %v1887 = vadd.f32 %v1472, %v1883
    %1888 = vst [vmem:[#allocation2] sm:$0xff] %v1886
    %1889 = vst [vmem:[#allocation2 + $0x8] sm:$0xff] %v1887
    // Predicated region
    $region26: #{tpu_custom_call.1} parent=1 // pred_check
      _
    $region27: #{tpu_custom_call.1} parent=1 // pred_check_branch
      %1891 = sbr.rel (0) target = $region29
    $region28: #{tpu_custom_call.1} parent=1 // pred_region
      %s1893 = ssub.s32 256, 256
      %1894 = vsyncadd [#allocation3], %s1893
      %s1895 = sshll.u32 [#allocation2], 4
      %s1896 = int_to_ptr.vmem [resolvable:$true] %s1895
      %1901 = dma.vmem_to_hbm [thread:$0]  %s1896, 256, %s6, [#allocation3], 128, 128, 8
    $region29: #{tpu_custom_call.1} parent=1 // pred_fallthru
      _
    // Predicated region
    $region30: #{tpu_custom_call.1} parent=1 // pred_check
      _
    $region31: #{tpu_custom_call.1} parent=1 // pred_check_branch
      %1903 = sbr.rel (0) target = $region33
    $region32: #{tpu_custom_call.1} parent=1 // pred_region
      %1904 = dma.done [#allocation3], 256
    $region33: #{tpu_custom_call.1} parent=1 // pred_fallthru
      _
    %1905 = vsyncpa [#allocation3], 1

</llo_original>
